<compile_context>
chip_gen: v7x
topology: tpu7x:2x2x1
jax: 0.10.0
libtpu: 0.0.40
codegen_flags: <defaults>
</compile_context>

<pallas_src>
import functools

import jax
import jax.numpy as jnp
import numpy as np
from jax.experimental import pallas as pl
from jax.experimental.pallas import tpu as pltpu

BEV_DIM = 1000   # fixed by the PyTorch module (nn.Linear(1000, hidden_dim1))
BEV_PAD = 1024   # padded to a multiple of 128 for dense vregs / clean MXU K
LANE = 128
SUBLANE = 8

LOG_2PI = float(np.log(2.0 * np.pi))
LOG_2 = float(np.log(2.0))


def _round_up(n, m):
    return ((n + m - 1) // m) * m


def _pad_to(a, shape):
    pads = [(0, t - s) for s, t in zip(a.shape, shape)]
    if all(p == (0, 0) for p in pads):
        return a
    return jnp.pad(a, pads)


def _softplus(z):
    # numerically stable softplus(z) = max(z, 0) + log1p(exp(-|z|))
    return jnp.maximum(z, 0.0) + jnp.log1p(jnp.exp(-jnp.abs(z)))


def actor_kernel(
    # batch-tiled inputs
    x_ref, p_ref, eps_ref,
    # resident weights / biases
    w_bev_ref, b_bev_ref,
    w1_ref, b1_ref,
    w2a_ref, w2b_ref, b2_ref,
    wh_ref, bh_ref,
    # output slab: [a | log_pi | zeros]
    out_ref,
    *, action_dim, pad_a, max_action,
):
    cdt = w_bev_ref.dtype  # compute (matmul operand) dtype, e.g. bf16

    # p = BEV_fc(p)
    p_h = jnp.dot(p_ref[...], w_bev_ref[...],
                  preferred_element_type=jnp.float32) + b_bev_ref[...]

    # h1 = relu(l1(x))
    h1 = jnp.dot(x_ref[...], w1_ref[...],
                 preferred_element_type=jnp.float32) + b1_ref[...]
    h1 = jnp.maximum(h1, 0.0)

    # h2 = relu(l2(cat([h1, p_h], -1)))  -- split matmul, w2 pre-split in wrapper
    h2 = (jnp.dot(h1.astype(cdt), w2a_ref[...], preferred_element_type=jnp.float32)
          + jnp.dot(p_h.astype(cdt), w2b_ref[...], preferred_element_type=jnp.float32)
          + b2_ref[...])
    h2 = jnp.maximum(h2, 0.0)

    # Fused mean / log_std heads: one lane-dense MXU push of width 2*pad_a.
    heads = jnp.dot(h2.astype(cdt), wh_ref[...],
                    preferred_element_type=jnp.float32) + bh_ref[...]
    mean = heads[:, :pad_a]
    log_std = jnp.clip(heads[:, pad_a:], -20.0, 2.0)
    std = jnp.exp(log_std)

    eps = eps_ref[...]
    a_pre = mean + std * eps        # rsample (eps == 0 <=> evaluate=True)

    # Normal(mean, std).log_prob(a_pre): z = (a_pre - mean)/std == eps exactly.
    log_prob = -0.5 * eps * eps - log_std - 0.5 * LOG_2PI
    # tanh-squash correction: 2*(log 2 - a - softplus(-2a))
    corr = 2.0 * (LOG_2 - a_pre - _softplus(-2.0 * a_pre))

    col = jax.lax.broadcasted_iota(jnp.int32, a_pre.shape, 1)
    valid = col < action_dim
    log_pi = jnp.sum(jnp.where(valid, log_prob - corr, 0.0),
                     axis=1, keepdims=True)

    a = max_action * jnp.tanh(a_pre)
    # Lane-dense output slab: columns [0, A) = action, column A = log_pi.
    out_ref[...] = jnp.where(col == action_dim, log_pi, a).astype(out_ref.dtype)


def actor_forward(x, p, eps, params, *, hidden_dim, max_action=1.0,
                  batch_tile=512, compute_dtype=jnp.bfloat16):
    """Fused Actor forward. Returns (a, log_pi)."""
    B, state_dim = x.shape
    assert p.shape == (B, BEV_DIM)
    action_dim = params["wm"].shape[1]
    assert eps.shape == (B, action_dim)

    H = hidden_dim
    H_pad = _round_up(H, LANE)
    S_pad = _round_up(state_dim, LANE)
    pad_a = _round_up(action_dim + 1, LANE)   # room for [a | log_pi] in one slab

    # Batch tiling: tile is a multiple of 8; pad batch up to a tile multiple.
    tb = min(int(batch_tile), _round_up(B, SUBLANE))
    tb = _round_up(tb, SUBLANE)
    B_pad = _round_up(B, tb)
    grid = (B_pad // tb,)

    f32 = jnp.float32

    # --- pad & cast activations (zero padding keeps the math exact) ---------
    x_p = _pad_to(x.astype(f32), (B_pad, S_pad)).astype(compute_dtype)
    p_p = _pad_to(p.astype(f32), (B_pad, BEV_PAD)).astype(compute_dtype)
    eps_p = _pad_to(eps.astype(f32), (B_pad, pad_a))          # f32 epilogue input

    # --- pad & cast weights ((in, out) layout); biases stay f32 -------------
    def wpad(w, shape):
        return _pad_to(w.astype(f32), shape).astype(compute_dtype)

    def bpad(b, width):
        return _pad_to(b.reshape(1, -1).astype(f32), (1, width))

    w_bev = wpad(params["w_bev"], (BEV_PAD, H_pad))
    b_bev = bpad(params["b_bev"], H_pad)
    w1 = wpad(params["w1"], (S_pad, H_pad))
    b1 = bpad(params["b1"], H_pad)
    w2a = wpad(params["w2"][:H], (H_pad, H_pad))     # cat([h1, p_h]) @ W2 split
    w2b = wpad(params["w2"][H:], (H_pad, H_pad))
    b2 = bpad(params["b2"], H_pad)
    wh = jnp.concatenate(
        [_pad_to(params["wm"].astype(f32), (H_pad, pad_a)),
         _pad_to(params["ws"].astype(f32), (H_pad, pad_a))],
        axis=1).astype(compute_dtype)                 # fused heads (H_pad, 2*pad_a)
    bh = jnp.concatenate([bpad(params["bm"], pad_a), bpad(params["bs"], pad_a)], axis=1)

    kernel = functools.partial(actor_kernel, action_dim=action_dim,
                               pad_a=pad_a, max_action=float(max_action))

    def blocked(width):
        return pl.BlockSpec((tb, width), lambda i: (i, 0))

    def resident(shape):
        return pl.BlockSpec(shape, lambda i: (0, 0))

    flops = 2 * B_pad * (BEV_PAD * H_pad + S_pad * H_pad
                         + 2 * H_pad * H_pad + H_pad * 2 * pad_a)
    transcendentals = 4 * B_pad * pad_a
    bytes_accessed = sum(int(np.prod(a.shape)) * a.dtype.itemsize
                         for a in (x_p, p_p, eps_p, w_bev, b_bev, w1, b1,
                                   w2a, w2b, b2, wh, bh))
    bytes_accessed += B_pad * pad_a * 4  # output slab

    out = pl.pallas_call(
        kernel,
        grid=grid,
        out_shape=jax.ShapeDtypeStruct((B_pad, pad_a), jnp.float32),
        in_specs=[
            blocked(S_pad),                                   # x
            blocked(BEV_PAD),                                 # p
            blocked(pad_a),                                   # eps
            resident((BEV_PAD, H_pad)), resident((1, H_pad)),  # BEV_fc
            resident((S_pad, H_pad)), resident((1, H_pad)),    # l1
            resident((H_pad, H_pad)), resident((H_pad, H_pad)), resident((1, H_pad)),  # l2
            resident((H_pad, 2 * pad_a)), resident((1, 2 * pad_a)),  # fused heads
        ],
        out_specs=pl.BlockSpec((tb, pad_a), lambda i: (i, 0)),
        compiler_params=pltpu.CompilerParams(
            dimension_semantics=("parallel",),
            vmem_limit_bytes=64 * 1024 * 1024,
        ),
        cost_estimate=pl.CostEstimate(
            flops=flops,
            transcendentals=transcendentals,
            bytes_accessed=bytes_accessed,
        ),
    )(x_p, p_p, eps_p, w_bev, b_bev, w1, b1, w2a, w2b, b2, wh, bh)

    a = out[:B, :action_dim]
    log_pi = out[:B, action_dim:action_dim + 1]
    return a, log_pi


def actor_reference(x, p, eps, params, *, max_action=1.0):
    """Pure-JAX reference mirroring the PyTorch module."""
    p_h = p @ params["w_bev"] + params["b_bev"]
    h1 = jax.nn.relu(x @ params["w1"] + params["b1"])
    h = jnp.concatenate([h1, p_h], axis=-1)
    h2 = jax.nn.relu(h @ params["w2"] + params["b2"])
    mean = h2 @ params["wm"] + params["bm"]
    log_std = jnp.clip(h2 @ params["ws"] + params["bs"], -20.0, 2.0)
    std = jnp.exp(log_std)
    a_pre = mean + std * eps
    log_prob = -0.5 * jnp.square((a_pre - mean) / std) - log_std - 0.5 * LOG_2PI
    log_pi = jnp.sum(log_prob, axis=1, keepdims=True)
    log_pi -= jnp.sum(2.0 * (LOG_2 - a_pre - jax.nn.softplus(-2.0 * a_pre)),
                      axis=1, keepdims=True)
    a = max_action * jnp.tanh(a_pre)
    return a, log_pi


def init_params(key, state_dim, hidden_dim, action_dim):
    """Deterministic PyTorch-Linear-style init (uniform(-1/sqrt(fan_in), ...))."""
    def linear(k, fan_in, fan_out):
        kw, kb = jax.random.split(k)
        bound = 1.0 / np.sqrt(fan_in)
        w = jax.random.uniform(kw, (fan_in, fan_out), jnp.float32, -bound, bound)
        b = jax.random.uniform(kb, (fan_out,), jnp.float32, -bound, bound)
        return w, b.reshape(1, fan_out)

    keys = jax.random.split(key, 5)
    w_bev, b_bev = linear(keys[0], BEV_DIM, hidden_dim)
    w1, b1 = linear(keys[1], state_dim, hidden_dim)
    w2, b2 = linear(keys[2], 2 * hidden_dim, hidden_dim)
    wm, bm = linear(keys[3], hidden_dim, action_dim)
    ws, bs = linear(keys[4], hidden_dim, action_dim)
    return dict(w_bev=w_bev, b_bev=b_bev, w1=w1, b1=b1, w2=w2, b2=b2,
                wm=wm, bm=bm, ws=ws, bs=bs)


if __name__ == "__main__":
    # Small shapes consistent with the module (args.*):
    batch = 2
    state_dim = 16
    hidden_dim = 32
    action_dim = 4

    key = jax.random.PRNGKey(0)
    k_param, k_x, k_p, k_eps = jax.random.split(key, 4)

    params = init_params(k_param, state_dim, hidden_dim, action_dim)
    x = jax.random.normal(k_x, (batch, state_dim), jnp.float32)
    p = jax.random.normal(k_p, (batch, BEV_DIM), jnp.float32)
    # eps ~ N(0,1) for the rsample path (use zeros for evaluate=True semantics)
    eps = jax.random.normal(k_eps, (batch, action_dim), jnp.float32)

    # Correctness check against pure-JAX reference using the f32 compute path.
    a32, lp32 = actor_forward(x, p, eps, params, hidden_dim=hidden_dim,
                              max_action=1.0, compute_dtype=jnp.float32)
    a_ref, lp_ref = actor_reference(x, p, eps, params, max_action=1.0)
    jax.block_until_ready((a32, lp32, a_ref, lp_ref))
    np.testing.assert_allclose(np.asarray(a32), np.asarray(a_ref), rtol=5e-2, atol=5e-2)
    np.testing.assert_allclose(np.asarray(lp32), np.asarray(lp_ref), rtol=5e-2, atol=5e-2)

    # Default fast path (bf16 matmul operands, f32 accumulation / epilogue).
    a, log_pi = actor_forward(x, p, eps, params, hidden_dim=hidden_dim, max_action=1.0)
    jax.block_until_ready((a, log_pi))

    assert a.shape == (batch, action_dim)
    assert log_pi.shape == (batch, 1)
    assert bool(jnp.all(jnp.isfinite(a))) and bool(jnp.all(jnp.isfinite(log_pi)))
    print("KERNEL_OK")
</pallas_src>

<mosaic_0001>
module attributes {stable_mosaic.version = 11 : i64} {
  func.func @actor_kernel(%arg0: i32, %arg1: memref<8x128xf32, #tpu.memory_space<vmem>>, %arg2: memref<8x1024xf32, #tpu.memory_space<vmem>>, %arg3: memref<8x128xf32, #tpu.memory_space<vmem>>, %arg4: memref<1024x128xf32, #tpu.memory_space<vmem>>, %arg5: memref<1x128xf32, #tpu.memory_space<vmem>>, %arg6: memref<128x128xf32, #tpu.memory_space<vmem>>, %arg7: memref<1x128xf32, #tpu.memory_space<vmem>>, %arg8: memref<128x128xf32, #tpu.memory_space<vmem>>, %arg9: memref<128x128xf32, #tpu.memory_space<vmem>>, %arg10: memref<1x128xf32, #tpu.memory_space<vmem>>, %arg11: memref<128x256xf32, #tpu.memory_space<vmem>>, %arg12: memref<1x256xf32, #tpu.memory_space<vmem>>, %arg13: memref<8x128xf32, #tpu.memory_space<vmem>>) attributes {dimension_semantics = [#tpu.dimension_semantics<parallel>], iteration_bounds = array<i64: 1>, scalar_prefetch = 0 : i64, scratch_operands = 0 : i64, tpu.core_type = #tpu.core_type<tc>, window_params = [{transform_indices = @transform_0, window_bounds = array<i64: 8, 128>}, {transform_indices = @transform_1, window_bounds = array<i64: 8, 1024>}, {transform_indices = @transform_2, window_bounds = array<i64: 8, 128>}, {pipeline_mode = #tpu.pipeline_mode<synchronous>, transform_indices = @transform_3, window_bounds = array<i64: 1024, 128>}, {pipeline_mode = #tpu.pipeline_mode<synchronous>, transform_indices = @transform_4, window_bounds = array<i64: 1, 128>}, {pipeline_mode = #tpu.pipeline_mode<synchronous>, transform_indices = @transform_5, window_bounds = array<i64: 128, 128>}, {pipeline_mode = #tpu.pipeline_mode<synchronous>, transform_indices = @transform_6, window_bounds = array<i64: 1, 128>}, {pipeline_mode = #tpu.pipeline_mode<synchronous>, transform_indices = @transform_7, window_bounds = array<i64: 128, 128>}, {pipeline_mode = #tpu.pipeline_mode<synchronous>, transform_indices = @transform_8, window_bounds = array<i64: 128, 128>}, {pipeline_mode = #tpu.pipeline_mode<synchronous>, transform_indices = @transform_9, window_bounds = array<i64: 1, 128>}, {pipeline_mode = #tpu.pipeline_mode<synchronous>, transform_indices = @transform_10, window_bounds = array<i64: 128, 256>}, {pipeline_mode = #tpu.pipeline_mode<synchronous>, transform_indices = @transform_11, window_bounds = array<i64: 1, 256>}, {transform_indices = @transform_12, window_bounds = array<i64: 8, 128>}]} {
    %c0 = arith.constant 0 : index
    %c0_0 = arith.constant 0 : index
    %0 = vector.load %arg2[%c0, %c0_0] : memref<8x1024xf32, #tpu.memory_space<vmem>>, vector<8x1024xf32>
    %c0_1 = arith.constant 0 : index
    %c0_2 = arith.constant 0 : index
    %1 = vector.load %arg4[%c0_1, %c0_2] : memref<1024x128xf32, #tpu.memory_space<vmem>>, vector<1024x128xf32>
    %cst = arith.constant dense<0.000000e+00> : vector<8x128xf32>
    %2 = tpu.matmul %0, %1, %cst {dimension_numbers = #tpu.dot_dimension_numbers<[1], [0], [0], [1], [0, 0, 1, 1], [], []>} : vector<8x1024xf32>, vector<1024x128xf32>, vector<8x128xf32> -> vector<8x128xf32>
    %c0_3 = arith.constant 0 : index
    %c0_4 = arith.constant 0 : index
    %3 = vector.load %arg5[%c0_3, %c0_4] : memref<1x128xf32, #tpu.memory_space<vmem>>, vector<1x128xf32>
    %4 = vector.broadcast %3 : vector<1x128xf32> to vector<8x128xf32>
    %5 = arith.addf %2, %4 : vector<8x128xf32>
    %c0_5 = arith.constant 0 : index
    %c0_6 = arith.constant 0 : index
    %6 = vector.load %arg1[%c0_5, %c0_6] : memref<8x128xf32, #tpu.memory_space<vmem>>, vector<8x128xf32>
    %c0_7 = arith.constant 0 : index
    %c0_8 = arith.constant 0 : index
    %7 = vector.load %arg6[%c0_7, %c0_8] : memref<128x128xf32, #tpu.memory_space<vmem>>, vector<128x128xf32>
    %cst_9 = arith.constant dense<0.000000e+00> : vector<8x128xf32>
    %8 = tpu.matmul %6, %7, %cst_9 {dimension_numbers = #tpu.dot_dimension_numbers<[1], [0], [0], [1], [0, 0, 1, 1], [], []>} : vector<8x128xf32>, vector<128x128xf32>, vector<8x128xf32> -> vector<8x128xf32>
    %c0_10 = arith.constant 0 : index
    %c0_11 = arith.constant 0 : index
    %9 = vector.load %arg7[%c0_10, %c0_11] : memref<1x128xf32, #tpu.memory_space<vmem>>, vector<1x128xf32>
    %10 = vector.broadcast %9 : vector<1x128xf32> to vector<8x128xf32>
    %11 = arith.addf %8, %10 : vector<8x128xf32>
    %cst_12 = arith.constant 0.000000e+00 : f32
    %12 = vector.broadcast %cst_12 : f32 to vector<8x128xf32>
    %13 = arith.maximumf %11, %12 : vector<8x128xf32>
    %c0_13 = arith.constant 0 : index
    %c0_14 = arith.constant 0 : index
    %14 = vector.load %arg8[%c0_13, %c0_14] : memref<128x128xf32, #tpu.memory_space<vmem>>, vector<128x128xf32>
    %cst_15 = arith.constant dense<0.000000e+00> : vector<8x128xf32>
    %15 = tpu.matmul %13, %14, %cst_15 {dimension_numbers = #tpu.dot_dimension_numbers<[1], [0], [0], [1], [0, 0, 1, 1], [], []>} : vector<8x128xf32>, vector<128x128xf32>, vector<8x128xf32> -> vector<8x128xf32>
    %c0_16 = arith.constant 0 : index
    %c0_17 = arith.constant 0 : index
    %16 = vector.load %arg9[%c0_16, %c0_17] : memref<128x128xf32, #tpu.memory_space<vmem>>, vector<128x128xf32>
    %cst_18 = arith.constant dense<0.000000e+00> : vector<8x128xf32>
    %17 = tpu.matmul %5, %16, %cst_18 {dimension_numbers = #tpu.dot_dimension_numbers<[1], [0], [0], [1], [0, 0, 1, 1], [], []>} : vector<8x128xf32>, vector<128x128xf32>, vector<8x128xf32> -> vector<8x128xf32>
    %18 = arith.addf %15, %17 : vector<8x128xf32>
    %c0_19 = arith.constant 0 : index
    %c0_20 = arith.constant 0 : index
    %19 = vector.load %arg10[%c0_19, %c0_20] : memref<1x128xf32, #tpu.memory_space<vmem>>, vector<1x128xf32>
    %20 = vector.broadcast %19 : vector<1x128xf32> to vector<8x128xf32>
    %21 = arith.addf %18, %20 : vector<8x128xf32>
    %cst_21 = arith.constant 0.000000e+00 : f32
    %22 = vector.broadcast %cst_21 : f32 to vector<8x128xf32>
    %23 = arith.maximumf %21, %22 : vector<8x128xf32>
    %c0_22 = arith.constant 0 : index
    %c0_23 = arith.constant 0 : index
    %24 = vector.load %arg11[%c0_22, %c0_23] : memref<128x256xf32, #tpu.memory_space<vmem>>, vector<128x256xf32>
    %cst_24 = arith.constant dense<0.000000e+00> : vector<8x256xf32>
    %25 = tpu.matmul %23, %24, %cst_24 {dimension_numbers = #tpu.dot_dimension_numbers<[1], [0], [0], [1], [0, 0, 1, 1], [], []>} : vector<8x128xf32>, vector<128x256xf32>, vector<8x256xf32> -> vector<8x256xf32>
    %c0_25 = arith.constant 0 : index
    %c0_26 = arith.constant 0 : index
    %26 = vector.load %arg12[%c0_25, %c0_26] : memref<1x256xf32, #tpu.memory_space<vmem>>, vector<1x256xf32>
    %27 = vector.broadcast %26 : vector<1x256xf32> to vector<8x256xf32>
    %28 = arith.addf %25, %27 : vector<8x256xf32>
    %29 = vector.extract_strided_slice %28 {offsets = [0, 0], sizes = [8, 128], strides = [1, 1]} : vector<8x256xf32> to vector<8x128xf32>
    %30 = vector.extract_strided_slice %28 {offsets = [0, 128], sizes = [8, 128], strides = [1, 1]} : vector<8x256xf32> to vector<8x128xf32>
    %cst_27 = arith.constant -2.000000e+01 : f32
    %cst_28 = arith.constant 2.000000e+00 : f32
    %31 = vector.broadcast %cst_27 : f32 to vector<8x128xf32>
    %32 = arith.maximumf %31, %30 : vector<8x128xf32>
    %33 = vector.broadcast %cst_28 : f32 to vector<8x128xf32>
    %34 = arith.minimumf %33, %32 : vector<8x128xf32>
    %35 = math.exp %34 : vector<8x128xf32>
    %c0_29 = arith.constant 0 : index
    %c0_30 = arith.constant 0 : index
    %36 = vector.load %arg3[%c0_29, %c0_30] : memref<8x128xf32, #tpu.memory_space<vmem>>, vector<8x128xf32>
    %37 = arith.mulf %35, %36 : vector<8x128xf32>
    %38 = arith.addf %29, %37 : vector<8x128xf32>
    %cst_31 = arith.constant -5.000000e-01 : f32
    %39 = vector.broadcast %cst_31 : f32 to vector<8x128xf32>
    %40 = arith.mulf %39, %36 : vector<8x128xf32>
    %41 = arith.mulf %40, %36 : vector<8x128xf32>
    %42 = arith.subf %41, %34 : vector<8x128xf32>
    %cst_32 = arith.constant 0.918938517 : f32
    %43 = vector.broadcast %cst_32 : f32 to vector<8x128xf32>
    %44 = arith.subf %42, %43 : vector<8x128xf32>
    %cst_33 = arith.constant 0.693147182 : f32
    %45 = vector.broadcast %cst_33 : f32 to vector<8x128xf32>
    %46 = arith.subf %45, %38 : vector<8x128xf32>
    %cst_34 = arith.constant -2.000000e+00 : f32
    %47 = vector.broadcast %cst_34 : f32 to vector<8x128xf32>
    %48 = arith.mulf %47, %38 : vector<8x128xf32>
    %cst_35 = arith.constant 0.000000e+00 : f32
    %49 = vector.broadcast %cst_35 : f32 to vector<8x128xf32>
    %50 = arith.maximumf %48, %49 : vector<8x128xf32>
    %51 = math.absf %48 : vector<8x128xf32>
    %cst_36 = arith.constant 0.000000e+00 : f32
    %52 = vector.broadcast %cst_36 : f32 to vector<8x128xf32>
    %53 = arith.subf %52, %51 : vector<8x128xf32>
    %54 = math.exp %53 : vector<8x128xf32>
    %55 = math.log1p %54 : vector<8x128xf32>
    %56 = arith.addf %50, %55 : vector<8x128xf32>
    %57 = arith.subf %46, %56 : vector<8x128xf32>
    %cst_37 = arith.constant 2.000000e+00 : f32
    %58 = vector.broadcast %cst_37 : f32 to vector<8x128xf32>
    %59 = arith.mulf %58, %57 : vector<8x128xf32>
    %60 = tpu.iota {dimensions = array<i32: 1>} : vector<8x128xi32>
    %c4_i32 = arith.constant 4 : i32
    %61 = vector.broadcast %c4_i32 : i32 to vector<8x128xi32>
    %62 = arith.cmpi slt, %60, %61 : vector<8x128xi32>
    %63 = arith.subf %44, %59 : vector<8x128xf32>
    %cst_38 = arith.constant 0.000000e+00 : f32
    %64 = vector.broadcast %cst_38 : f32 to vector<8x128xf32>
    %65 = arith.select %62, %63, %64 : vector<8x128xi1>, vector<8x128xf32>
    %cst_39 = arith.constant dense<0.000000e+00> : vector<8xf32>
    %66 = vector.multi_reduction <add>, %65, %cst_39 [1] : vector<8x128xf32> to vector<8xf32>
    %67 = vector.shape_cast %66 : vector<8xf32> to vector<8x1xf32>
    %68 = math.tanh %38 : vector<8x128xf32>
    %cst_40 = arith.constant 1.000000e+00 : f32
    %69 = vector.broadcast %cst_40 : f32 to vector<8x128xf32>
    %70 = arith.mulf %69, %68 : vector<8x128xf32>
    %c4_i32_41 = arith.constant 4 : i32
    %71 = vector.broadcast %c4_i32_41 : i32 to vector<8x128xi32>
    %72 = arith.cmpi eq, %60, %71 : vector<8x128xi32>
    %73 = vector.shape_cast %67 : vector<8x1xf32> to vector<8x1xf32>
    %74 = vector.broadcast %73 : vector<8x1xf32> to vector<8x128xf32>
    %75 = arith.select %72, %74, %70 : vector<8x128xi1>, vector<8x128xf32>
    %c0_42 = arith.constant 0 : index
    %c0_43 = arith.constant 0 : index
    %76 = vector.load %arg13[%c0_42, %c0_43] : memref<8x128xf32, #tpu.memory_space<vmem>>, vector<8x128xf32>
    tpu.vector_store %arg13[%c0_42, %c0_43], %75 {strides = array<i32>} : memref<8x128xf32, #tpu.memory_space<vmem>>, vector<8x128xf32>,
    return
  }
  func.func @transform_0(%arg0: i32) -> (i32, i32) {
    %c0_i32 = arith.constant 0 : i32
    %c0_i32_0 = arith.constant 0 : i32
    return %arg0, %c0_i32 : i32, i32
  }
  func.func @transform_1(%arg0: i32) -> (i32, i32) {
    %c0_i32 = arith.constant 0 : i32
    %c0_i32_0 = arith.constant 0 : i32
    return %arg0, %c0_i32 : i32, i32
  }
  func.func @transform_2(%arg0: i32) -> (i32, i32) {
    %c0_i32 = arith.constant 0 : i32
    %c0_i32_0 = arith.constant 0 : i32
    return %arg0, %c0_i32 : i32, i32
  }
  func.func @transform_3(%arg0: i32) -> (i32, i32) {
    %c0_i32 = arith.constant 0 : i32
    %c0_i32_0 = arith.constant 0 : i32
    %c0_i32_1 = arith.constant 0 : i32
    return %c0_i32, %c0_i32_0 : i32, i32
  }
  func.func @transform_4(%arg0: i32) -> (i32, i32) {
    %c0_i32 = arith.constant 0 : i32
    %c0_i32_0 = arith.constant 0 : i32
    %c0_i32_1 = arith.constant 0 : i32
    return %c0_i32, %c0_i32_0 : i32, i32
  }
  func.func @transform_5(%arg0: i32) -> (i32, i32) {
    %c0_i32 = arith.constant 0 : i32
    %c0_i32_0 = arith.constant 0 : i32
    %c0_i32_1 = arith.constant 0 : i32
    return %c0_i32, %c0_i32_0 : i32, i32
  }
  func.func @transform_6(%arg0: i32) -> (i32, i32) {
    %c0_i32 = arith.constant 0 : i32
    %c0_i32_0 = arith.constant 0 : i32
    %c0_i32_1 = arith.constant 0 : i32
    return %c0_i32, %c0_i32_0 : i32, i32
  }
  func.func @transform_7(%arg0: i32) -> (i32, i32) {
    %c0_i32 = arith.constant 0 : i32
    %c0_i32_0 = arith.constant 0 : i32
    %c0_i32_1 = arith.constant 0 : i32
    return %c0_i32, %c0_i32_0 : i32, i32
  }
  func.func @transform_8(%arg0: i32) -> (i32, i32) {
    %c0_i32 = arith.constant 0 : i32
    %c0_i32_0 = arith.constant 0 : i32
    %c0_i32_1 = arith.constant 0 : i32
    return %c0_i32, %c0_i32_0 : i32, i32
  }
  func.func @transform_9(%arg0: i32) -> (i32, i32) {
    %c0_i32 = arith.constant 0 : i32
    %c0_i32_0 = arith.constant 0 : i32
    %c0_i32_1 = arith.constant 0 : i32
    return %c0_i32, %c0_i32_0 : i32, i32
  }
  func.func @transform_10(%arg0: i32) -> (i32, i32) {
    %c0_i32 = arith.constant 0 : i32
    %c0_i32_0 = arith.constant 0 : i32
    %c0_i32_1 = arith.constant 0 : i32
    return %c0_i32, %c0_i32_0 : i32, i32
  }
  func.func @transform_11(%arg0: i32) -> (i32, i32) {
    %c0_i32 = arith.constant 0 : i32
    %c0_i32_0 = arith.constant 0 : i32
    %c0_i32_1 = arith.constant 0 : i32
    return %c0_i32, %c0_i32_0 : i32, i32
  }
  func.func @transform_12(%arg0: i32) -> (i32, i32) {
    %c0_i32 = arith.constant 0 : i32
    %c0_i32_0 = arith.constant 0 : i32
    return %arg0, %c0_i32 : i32, i32
  }
}

</mosaic_0001>

<llo_original>
// kernel: tpu_custom_call.1
$region0: #{tpu_custom_call.1}
  #allocation0 [shape = 'u32[]', space=smem, size = 0x4, offset = 0x4, fixed_abs, tag = 'smem constant byte address 0x4 - core index']
  #allocation1 [shape = 'u32[144,128]{1,0:T(1,128)}', space=vmem, size = 0x12000, scoped, tag = 'internal scratch']
  %s0 = inlined_call_operand.hbm [shape: f32[8,128], index: 0, kind: input, shape index: {}]
  %s1 = inlined_call_operand.hbm [shape: f32[8,1024], index: 1, kind: input, shape index: {}]
  %s2 = inlined_call_operand.hbm [shape: f32[8,128], index: 2, kind: input, shape index: {}]
  %s3 = inlined_call_operand.hbm [shape: f32[1024,128], index: 3, kind: input, shape index: {}]
  %s4 = inlined_call_operand.hbm [shape: f32[1,128], index: 4, kind: input, shape index: {}]
  %s5 = inlined_call_operand.hbm [shape: f32[128,128], index: 5, kind: input, shape index: {}]
  %s6 = inlined_call_operand.hbm [shape: f32[1,128], index: 6, kind: input, shape index: {}]
  %s7 = inlined_call_operand.hbm [shape: f32[128,128], index: 7, kind: input, shape index: {}]
  %s8 = inlined_call_operand.hbm [shape: f32[128,128], index: 8, kind: input, shape index: {}]
  %s9 = inlined_call_operand.hbm [shape: f32[1,128], index: 9, kind: input, shape index: {}]
  %s10 = inlined_call_operand.hbm [shape: f32[128,256], index: 10, kind: input, shape index: {}]
  %s11 = inlined_call_operand.hbm [shape: f32[1,256], index: 11, kind: input, shape index: {}]
  %s12 = inlined_call_operand.hbm [shape: f32[8,128], index: 12, kind: output, shape index: {}]
  %s13 = sld [smem:[#allocation0]]
  $region106: #{tpu_custom_call.1} parent=0
    _
  %s15 = ssub.s32 1, %s13
  %s16 = scalar_select 0, %s15, %s13
  $region1: #{tpu_custom_call.1} parent=0
    #allocation2 [shape = 'u8[4096]{0}', space=vmem, size = 0x1000, scoped, tag = 'input window, operand 0, single buffered']
    #allocation3 [shape = 's32[1]{0}', space=sflag, size = 0x4, scoped, tag = 'scoped memory for tpu_custom_call.1']
    #allocation4 [shape = 's32[1]{0}', space=sflag, size = 0x4, scoped, tag = 'scoped memory for tpu_custom_call.1']
    #allocation5 [shape = 'u8[32768]{0}', space=vmem, size = 0x8000, scoped, tag = 'input window, operand 1, single buffered']
    #allocation6 [shape = 's32[1]{0}', space=sflag, size = 0x4, scoped, tag = 'scoped memory for tpu_custom_call.1']
    #allocation7 [shape = 'u8[4096]{0}', space=vmem, size = 0x1000, scoped, tag = 'input window, operand 2, single buffered']
    #allocation8 [shape = 'u8[524288]{0}', space=vmem, size = 0x80000, scoped, tag = 'input window, operand 3, single buffered']
    #allocation9 [shape = 's32[1]{0}', space=sflag, size = 0x4, scoped, tag = 'scoped memory for tpu_custom_call.1']
    #allocation10 [shape = 'u8[512]{0}', space=vmem, size = 0x400, scoped, tag = 'input window, operand 4, single buffered']
    #allocation11 [shape = 'u8[65536]{0}', space=vmem, size = 0x10000, scoped, tag = 'input window, operand 5, single buffered']
    #allocation12 [shape = 's32[1]{0}', space=sflag, size = 0x4, scoped, tag = 'scoped memory for tpu_custom_call.1']
    #allocation13 [shape = 'u8[512]{0}', space=vmem, size = 0x400, scoped, tag = 'input window, operand 6, single buffered']
    #allocation14 [shape = 'u8[65536]{0}', space=vmem, size = 0x10000, scoped, tag = 'input window, operand 7, single buffered']
    #allocation15 [shape = 's32[1]{0}', space=sflag, size = 0x4, scoped, tag = 'scoped memory for tpu_custom_call.1']
    #allocation16 [shape = 'u8[65536]{0}', space=vmem, size = 0x10000, scoped, tag = 'input window, operand 8, single buffered']
    #allocation17 [shape = 'u8[512]{0}', space=vmem, size = 0x400, scoped, tag = 'input window, operand 9, single buffered']
    #allocation18 [shape = 's32[1]{0}', space=sflag, size = 0x4, scoped, tag = 'scoped memory for tpu_custom_call.1']
    #allocation19 [shape = 'u8[131072]{0}', space=vmem, size = 0x20000, scoped, tag = 'input window, operand 10, single buffered']
    #allocation20 [shape = 'u8[1024]{0}', space=vmem, size = 0x400, scoped, tag = 'input window, operand 11, single buffered']
    #allocation21 [shape = 's32[1]{0}', space=sflag, size = 0x4, scoped, tag = 'scoped memory for tpu_custom_call.1']
    #allocation22 [shape = 'u8[4096]{0}', space=vmem, size = 0x1000, scoped, tag = 'output window, operand 0, single buffered']
    %17 = vsyncpa [#allocation3], 0
    %18 = vsyncpa [#allocation6], 0
    %19 = vsyncpa [#allocation9], 0
    %20 = vsyncpa [#allocation12], 0
    %21 = vsyncpa [#allocation15], 0
    %22 = vsyncpa [#allocation18], 0
    %23 = vsyncpa [#allocation21], 0
    %24 = vsyncpa [#allocation4], 0
    // Predicated region
    $region2: #{tpu_custom_call.1} parent=1 // pred_check
      _
    $region3: #{tpu_custom_call.1} parent=1 // pred_check_branch
      %26 = sbr.rel (0) target = $region5
    $region4: #{tpu_custom_call.1} parent=1 // pred_region
      %s28 = ssub.s32 128, 128
      %29 = vsyncadd [#allocation3], %s28
      %s31 = sshll.u32 [#allocation2], 4
      %s32 = int_to_ptr.vmem [resolvable:$true] %s31
      %34 = dma.hbm_to_vmem [thread:$0]  %s0, 128, %s32, [#allocation3]
    $region5: #{tpu_custom_call.1} parent=1 // pred_fallthru
      _
    // Predicated region
    $region6: #{tpu_custom_call.1} parent=1 // pred_check
      _
    $region7: #{tpu_custom_call.1} parent=1 // pred_check_branch
      %36 = sbr.rel (0) target = $region9
    $region8: #{tpu_custom_call.1} parent=1 // pred_region
      %s38 = ssub.s32 1024, 1024
      %39 = vsyncadd [#allocation6], %s38
      %s41 = sshll.u32 [#allocation5], 4
      %s42 = int_to_ptr.vmem [resolvable:$true] %s41
      %44 = dma.hbm_to_vmem [thread:$0]  %s1, 1024, %s42, [#allocation6]
    $region9: #{tpu_custom_call.1} parent=1 // pred_fallthru
      _
    // Predicated region
    $region10: #{tpu_custom_call.1} parent=1 // pred_check
      _
    $region11: #{tpu_custom_call.1} parent=1 // pred_check_branch
      %46 = sbr.rel (0) target = $region13
    $region12: #{tpu_custom_call.1} parent=1 // pred_region
      %s48 = ssub.s32 128, 128
      %49 = vsyncadd [#allocation6], %s48
      %s51 = sshll.u32 [#allocation7], 4
      %s52 = int_to_ptr.vmem [resolvable:$true] %s51
      %54 = dma.hbm_to_vmem [thread:$0]  %s2, 128, %s52, [#allocation6]
    $region13: #{tpu_custom_call.1} parent=1 // pred_fallthru
      _
    // Predicated region
    $region14: #{tpu_custom_call.1} parent=1 // pred_check
      _
    $region15: #{tpu_custom_call.1} parent=1 // pred_check_branch
      %56 = sbr.rel (0) target = $region17
    $region16: #{tpu_custom_call.1} parent=1 // pred_region
      %s58 = ssub.s32 16384, 16384
      %59 = vsyncadd [#allocation9], %s58
      %s60 = sshll.u32 [#allocation8], 4
      %s61 = int_to_ptr.vmem [resolvable:$true] %s60
      %66 = dma.hbm_to_vmem [thread:$0]  %s3, 16384, %s61, [#allocation9], 128, 128, 8
    $region17: #{tpu_custom_call.1} parent=1 // pred_fallthru
      _
    // Predicated region
    $region18: #{tpu_custom_call.1} parent=1 // pred_check
      _
    $region19: #{tpu_custom_call.1} parent=1 // pred_check_branch
      %68 = sbr.rel (0) target = $region21
    $region20: #{tpu_custom_call.1} parent=1 // pred_region
      %s70 = ssub.s32 16, 16
      %71 = vsyncadd [#allocation9], %s70
      %s73 = sshll.u32 [#allocation10], 4
      %s74 = int_to_ptr.vmem [resolvable:$true] %s73
      %76 = dma.hbm_to_vmem [thread:$0]  %s4, 16, %s74, [#allocation9]
    $region21: #{tpu_custom_call.1} parent=1 // pred_fallthru
      _
    // Predicated region
    $region22: #{tpu_custom_call.1} parent=1 // pred_check
      _
    $region23: #{tpu_custom_call.1} parent=1 // pred_check_branch
      %78 = sbr.rel (0) target = $region25
    $region24: #{tpu_custom_call.1} parent=1 // pred_region
      %s80 = ssub.s32 2048, 2048
      %81 = vsyncadd [#allocation12], %s80
      %s82 = sshll.u32 [#allocation11], 4
      %s83 = int_to_ptr.vmem [resolvable:$true] %s82
      %88 = dma.hbm_to_vmem [thread:$0]  %s5, 2048, %s83, [#allocation12], 128, 128, 8
    $region25: #{tpu_custom_call.1} parent=1 // pred_fallthru
      _
    // Predicated region
    $region26: #{tpu_custom_call.1} parent=1 // pred_check
      _
    $region27: #{tpu_custom_call.1} parent=1 // pred_check_branch
      %90 = sbr.rel (0) target = $region29
    $region28: #{tpu_custom_call.1} parent=1 // pred_region
      %s92 = ssub.s32 16, 16
      %93 = vsyncadd [#allocation12], %s92
      %s95 = sshll.u32 [#allocation13], 4
      %s96 = int_to_ptr.vmem [resolvable:$true] %s95
      %98 = dma.hbm_to_vmem [thread:$0]  %s6, 16, %s96, [#allocation12]
    $region29: #{tpu_custom_call.1} parent=1 // pred_fallthru
      _
    // Predicated region
    $region30: #{tpu_custom_call.1} parent=1 // pred_check
      _
    $region31: #{tpu_custom_call.1} parent=1 // pred_check_branch
      %100 = sbr.rel (0) target = $region33
    $region32: #{tpu_custom_call.1} parent=1 // pred_region
      %s102 = ssub.s32 2048, 2048
      %103 = vsyncadd [#allocation15], %s102
      %s104 = sshll.u32 [#allocation14], 4
      %s105 = int_to_ptr.vmem [resolvable:$true] %s104
      %110 = dma.hbm_to_vmem [thread:$0]  %s7, 2048, %s105, [#allocation15], 128, 128, 8
    $region33: #{tpu_custom_call.1} parent=1 // pred_fallthru
      _
    // Predicated region
    $region34: #{tpu_custom_call.1} parent=1 // pred_check
      _
    $region35: #{tpu_custom_call.1} parent=1 // pred_check_branch
      %112 = sbr.rel (0) target = $region37
    $region36: #{tpu_custom_call.1} parent=1 // pred_region
      %s114 = ssub.s32 2048, 2048
      %115 = vsyncadd [#allocation15], %s114
      %s116 = sshll.u32 [#allocation16], 4
      %s117 = int_to_ptr.vmem [resolvable:$true] %s116
      %122 = dma.hbm_to_vmem [thread:$0]  %s8, 2048, %s117, [#allocation15], 128, 128, 8
    $region37: #{tpu_custom_call.1} parent=1 // pred_fallthru
      _
    // Predicated region
    $region38: #{tpu_custom_call.1} parent=1 // pred_check
      _
    $region39: #{tpu_custom_call.1} parent=1 // pred_check_branch
      %124 = sbr.rel (0) target = $region41
    $region40: #{tpu_custom_call.1} parent=1 // pred_region
      %s126 = ssub.s32 16, 16
      %127 = vsyncadd [#allocation18], %s126
      %s129 = sshll.u32 [#allocation17], 4
      %s130 = int_to_ptr.vmem [resolvable:$true] %s129
      %132 = dma.hbm_to_vmem [thread:$0]  %s9, 16, %s130, [#allocation18]
    $region41: #{tpu_custom_call.1} parent=1 // pred_fallthru
      _
    // Predicated region
    $region42: #{tpu_custom_call.1} parent=1 // pred_check
      _
    $region43: #{tpu_custom_call.1} parent=1 // pred_check_branch
      %134 = sbr.rel (0) target = $region45
    $region44: #{tpu_custom_call.1} parent=1 // pred_region
      %s136 = ssub.s32 4096, 4096
      %137 = vsyncadd [#allocation18], %s136
      %s138 = sshll.u32 [#allocation19], 4
      %s139 = int_to_ptr.vmem [resolvable:$true] %s138
      %144 = dma.hbm_to_vmem [thread:$0]  %s10, 4096, %s139, [#allocation18], 256, 256, 16
    $region45: #{tpu_custom_call.1} parent=1 // pred_fallthru
      _
    // Predicated region
    $region46: #{tpu_custom_call.1} parent=1 // pred_check
      _
    $region47: #{tpu_custom_call.1} parent=1 // pred_check_branch
      %146 = sbr.rel (0) target = $region49
    $region48: #{tpu_custom_call.1} parent=1 // pred_region
      %s148 = ssub.s32 32, 32
      %149 = vsyncadd [#allocation21], %s148
      %s151 = sshll.u32 [#allocation20], 4
      %s152 = int_to_ptr.vmem [resolvable:$true] %s151
      %154 = dma.hbm_to_vmem [thread:$0]  %s11, 32, %s152, [#allocation21]
    $region49: #{tpu_custom_call.1} parent=1 // pred_fallthru
      _
    // Predicated region
    $region50: #{tpu_custom_call.1} parent=1 // pred_check
      _
    $region51: #{tpu_custom_call.1} parent=1 // pred_check_branch
      %156 = sbr.rel (0) target = $region53
    $region52: #{tpu_custom_call.1} parent=1 // pred_region
      %157 = dma.done [#allocation3], 128
    $region53: #{tpu_custom_call.1} parent=1 // pred_fallthru
      _
    // Predicated region
    $region54: #{tpu_custom_call.1} parent=1 // pred_check
      _
    $region55: #{tpu_custom_call.1} parent=1 // pred_check_branch
      %159 = sbr.rel (0) target = $region57
    $region56: #{tpu_custom_call.1} parent=1 // pred_region
      %160 = dma.done [#allocation6], 1024
    $region57: #{tpu_custom_call.1} parent=1 // pred_fallthru
      _
    // Predicated region
    $region58: #{tpu_custom_call.1} parent=1 // pred_check
      _
    $region59: #{tpu_custom_call.1} parent=1 // pred_check_branch
      %162 = sbr.rel (0) target = $region61
    $region60: #{tpu_custom_call.1} parent=1 // pred_region
      %163 = dma.done [#allocation6], 128
    $region61: #{tpu_custom_call.1} parent=1 // pred_fallthru
      _
    // Predicated region
    $region62: #{tpu_custom_call.1} parent=1 // pred_check
      _
    $region63: #{tpu_custom_call.1} parent=1 // pred_check_branch
      %165 = sbr.rel (0) target = $region65
    $region64: #{tpu_custom_call.1} parent=1 // pred_region
      %166 = dma.done [#allocation9], 16384
    $region65: #{tpu_custom_call.1} parent=1 // pred_fallthru
      _
    // Predicated region
    $region66: #{tpu_custom_call.1} parent=1 // pred_check
      _
    $region67: #{tpu_custom_call.1} parent=1 // pred_check_branch
      %168 = sbr.rel (0) target = $region69
    $region68: #{tpu_custom_call.1} parent=1 // pred_region
      %169 = dma.done [#allocation9], 16
    $region69: #{tpu_custom_call.1} parent=1 // pred_fallthru
      _
    // Predicated region
    $region70: #{tpu_custom_call.1} parent=1 // pred_check
      _
    $region71: #{tpu_custom_call.1} parent=1 // pred_check_branch
      %171 = sbr.rel (0) target = $region73
    $region72: #{tpu_custom_call.1} parent=1 // pred_region
      %172 = dma.done [#allocation12], 2048
    $region73: #{tpu_custom_call.1} parent=1 // pred_fallthru
      _
    // Predicated region
    $region74: #{tpu_custom_call.1} parent=1 // pred_check
      _
    $region75: #{tpu_custom_call.1} parent=1 // pred_check_branch
      %174 = sbr.rel (0) target = $region77
    $region76: #{tpu_custom_call.1} parent=1 // pred_region
      %175 = dma.done [#allocation12], 16
    $region77: #{tpu_custom_call.1} parent=1 // pred_fallthru
      _
    // Predicated region
    $region78: #{tpu_custom_call.1} parent=1 // pred_check
      _
    $region79: #{tpu_custom_call.1} parent=1 // pred_check_branch
      %177 = sbr.rel (0) target = $region81
    $region80: #{tpu_custom_call.1} parent=1 // pred_region
      %178 = dma.done [#allocation15], 2048
    $region81: #{tpu_custom_call.1} parent=1 // pred_fallthru
      _
    // Predicated region
    $region82: #{tpu_custom_call.1} parent=1 // pred_check
      _
    $region83: #{tpu_custom_call.1} parent=1 // pred_check_branch
      %180 = sbr.rel (0) target = $region85
    $region84: #{tpu_custom_call.1} parent=1 // pred_region
      %181 = dma.done [#allocation15], 2048
    $region85: #{tpu_custom_call.1} parent=1 // pred_fallthru
      _
    // Predicated region
    $region86: #{tpu_custom_call.1} parent=1 // pred_check
      _
    $region87: #{tpu_custom_call.1} parent=1 // pred_check_branch
      %183 = sbr.rel (0) target = $region89
    $region88: #{tpu_custom_call.1} parent=1 // pred_region
      %184 = dma.done [#allocation18], 16
    $region89: #{tpu_custom_call.1} parent=1 // pred_fallthru
      _
    // Predicated region
    $region90: #{tpu_custom_call.1} parent=1 // pred_check
      _
    $region91: #{tpu_custom_call.1} parent=1 // pred_check_branch
      %186 = sbr.rel (0) target = $region93
    $region92: #{tpu_custom_call.1} parent=1 // pred_region
      %187 = dma.done [#allocation18], 4096
    $region93: #{tpu_custom_call.1} parent=1 // pred_fallthru
      _
    // Predicated region
    $region94: #{tpu_custom_call.1} parent=1 // pred_check
      _
    $region95: #{tpu_custom_call.1} parent=1 // pred_check_branch
      %189 = sbr.rel (0) target = $region97
    $region96: #{tpu_custom_call.1} parent=1 // pred_region
      %190 = dma.done [#allocation21], 32
    $region97: #{tpu_custom_call.1} parent=1 // pred_fallthru
      _
    %v191 = vld [vmem:[#allocation5] sm:$0xff]
    %v192 = vld [vmem:[#allocation5 + $0x8] sm:$0xff]
    %v193 = vld [vmem:[#allocation5 + $0x10] sm:$0xff]
    %v194 = vld [vmem:[#allocation5 + $0x18] sm:$0xff]
    %v195 = vld [vmem:[#allocation5 + $0x20] sm:$0xff]
    %v196 = vld [vmem:[#allocation5 + $0x28] sm:$0xff]
    %v197 = vld [vmem:[#allocation5 + $0x30] sm:$0xff]
    %v198 = vld [vmem:[#allocation5 + $0x38] sm:$0xff]
    %v199 = vld [vmem:[#allocation8] sm:$0xff]
    %v200 = vld [vmem:[#allocation8 + $0x8] sm:$0xff]
    %v201 = vld [vmem:[#allocation8 + $0x10] sm:$0xff]
    %v202 = vld [vmem:[#allocation8 + $0x18] sm:$0xff]
    %v203 = vld [vmem:[#allocation8 + $0x20] sm:$0xff]
    %v204 = vld [vmem:[#allocation8 + $0x28] sm:$0xff]
    %v205 = vld [vmem:[#allocation8 + $0x30] sm:$0xff]
    %v206 = vld [vmem:[#allocation8 + $0x38] sm:$0xff]
    %v207 = vld [vmem:[#allocation8 + $0x40] sm:$0xff]
    %v208 = vld [vmem:[#allocation8 + $0x48] sm:$0xff]
    %v209 = vld [vmem:[#allocation8 + $0x50] sm:$0xff]
    %v210 = vld [vmem:[#allocation8 + $0x58] sm:$0xff]
    %v211 = vld [vmem:[#allocation8 + $0x60] sm:$0xff]
    %v212 = vld [vmem:[#allocation8 + $0x68] sm:$0xff]
    %v213 = vld [vmem:[#allocation8 + $0x70] sm:$0xff]
    %v214 = vld [vmem:[#allocation8 + $0x78] sm:$0xff]
    %v215 = vld [vmem:[#allocation8 + $0x80] sm:$0xff]
    %v216 = vld [vmem:[#allocation8 + $0x88] sm:$0xff]
    %v217 = vld [vmem:[#allocation8 + $0x90] sm:$0xff]
    %v218 = vld [vmem:[#allocation8 + $0x98] sm:$0xff]
    %v219 = vld [vmem:[#allocation8 + $0xa0] sm:$0xff]
    %v220 = vld [vmem:[#allocation8 + $0xa8] sm:$0xff]
    %v221 = vld [vmem:[#allocation8 + $0xb0] sm:$0xff]
    %v222 = vld [vmem:[#allocation8 + $0xb8] sm:$0xff]
    %v223 = vld [vmem:[#allocation8 + $0xc0] sm:$0xff]
    %v224 = vld [vmem:[#allocation8 + $0xc8] sm:$0xff]
    %v225 = vld [vmem:[#allocation8 + $0xd0] sm:$0xff]
    %v226 = vld [vmem:[#allocation8 + $0xd8] sm:$0xff]
    %v227 = vld [vmem:[#allocation8 + $0xe0] sm:$0xff]
    %v228 = vld [vmem:[#allocation8 + $0xe8] sm:$0xff]
    %v229 = vld [vmem:[#allocation8 + $0xf0] sm:$0xff]
    %v230 = vld [vmem:[#allocation8 + $0xf8] sm:$0xff]
    %v231 = vld [vmem:[#allocation8 + $0x100] sm:$0xff]
    %v232 = vld [vmem:[#allocation8 + $0x108] sm:$0xff]
    %v233 = vld [vmem:[#allocation8 + $0x110] sm:$0xff]
    %v234 = vld [vmem:[#allocation8 + $0x118] sm:$0xff]
    %v235 = vld [vmem:[#allocation8 + $0x120] sm:$0xff]
    %v236 = vld [vmem:[#allocation8 + $0x128] sm:$0xff]
    %v237 = vld [vmem:[#allocation8 + $0x130] sm:$0xff]
    %v238 = vld [vmem:[#allocation8 + $0x138] sm:$0xff]
    %v239 = vld [vmem:[#allocation8 + $0x140] sm:$0xff]
    %v240 = vld [vmem:[#allocation8 + $0x148] sm:$0xff]
    %v241 = vld [vmem:[#allocation8 + $0x150] sm:$0xff]
    %v242 = vld [vmem:[#allocation8 + $0x158] sm:$0xff]
    %v243 = vld [vmem:[#allocation8 + $0x160] sm:$0xff]
    %v244 = vld [vmem:[#allocation8 + $0x168] sm:$0xff]
    %v245 = vld [vmem:[#allocation8 + $0x170] sm:$0xff]
    %v246 = vld [vmem:[#allocation8 + $0x178] sm:$0xff]
    %v247 = vld [vmem:[#allocation8 + $0x180] sm:$0xff]
    %v248 = vld [vmem:[#allocation8 + $0x188] sm:$0xff]
    %v249 = vld [vmem:[#allocation8 + $0x190] sm:$0xff]
    %v250 = vld [vmem:[#allocation8 + $0x198] sm:$0xff]
    %v251 = vld [vmem:[#allocation8 + $0x1a0] sm:$0xff]
    %v252 = vld [vmem:[#allocation8 + $0x1a8] sm:$0xff]
    %v253 = vld [vmem:[#allocation8 + $0x1b0] sm:$0xff]
    %v254 = vld [vmem:[#allocation8 + $0x1b8] sm:$0xff]
    %v255 = vld [vmem:[#allocation8 + $0x1c0] sm:$0xff]
    %v256 = vld [vmem:[#allocation8 + $0x1c8] sm:$0xff]
    %v257 = vld [vmem:[#allocation8 + $0x1d0] sm:$0xff]
    %v258 = vld [vmem:[#allocation8 + $0x1d8] sm:$0xff]
    %v259 = vld [vmem:[#allocation8 + $0x1e0] sm:$0xff]
    %v260 = vld [vmem:[#allocation8 + $0x1e8] sm:$0xff]
    %v261 = vld [vmem:[#allocation8 + $0x1f0] sm:$0xff]
    %v262 = vld [vmem:[#allocation8 + $0x1f8] sm:$0xff]
    %v263 = vld [vmem:[#allocation8 + $0x200] sm:$0xff]
    %v264 = vld [vmem:[#allocation8 + $0x208] sm:$0xff]
    %v265 = vld [vmem:[#allocation8 + $0x210] sm:$0xff]
    %v266 = vld [vmem:[#allocation8 + $0x218] sm:$0xff]
    %v267 = vld [vmem:[#allocation8 + $0x220] sm:$0xff]
    %v268 = vld [vmem:[#allocation8 + $0x228] sm:$0xff]
    %v269 = vld [vmem:[#allocation8 + $0x230] sm:$0xff]
    %v270 = vld [vmem:[#allocation8 + $0x238] sm:$0xff]
    %v271 = vld [vmem:[#allocation8 + $0x240] sm:$0xff]
    %v272 = vld [vmem:[#allocation8 + $0x248] sm:$0xff]
    %v273 = vld [vmem:[#allocation8 + $0x250] sm:$0xff]
    %v274 = vld [vmem:[#allocation8 + $0x258] sm:$0xff]
    %v275 = vld [vmem:[#allocation8 + $0x260] sm:$0xff]
    %v276 = vld [vmem:[#allocation8 + $0x268] sm:$0xff]
    %v277 = vld [vmem:[#allocation8 + $0x270] sm:$0xff]
    %v278 = vld [vmem:[#allocation8 + $0x278] sm:$0xff]
    %v279 = vld [vmem:[#allocation8 + $0x280] sm:$0xff]
    %v280 = vld [vmem:[#allocation8 + $0x288] sm:$0xff]
    %v281 = vld [vmem:[#allocation8 + $0x290] sm:$0xff]
    %v282 = vld [vmem:[#allocation8 + $0x298] sm:$0xff]
    %v283 = vld [vmem:[#allocation8 + $0x2a0] sm:$0xff]
    %v284 = vld [vmem:[#allocation8 + $0x2a8] sm:$0xff]
    %v285 = vld [vmem:[#allocation8 + $0x2b0] sm:$0xff]
    %v286 = vld [vmem:[#allocation8 + $0x2b8] sm:$0xff]
    %v287 = vld [vmem:[#allocation8 + $0x2c0] sm:$0xff]
    %v288 = vld [vmem:[#allocation8 + $0x2c8] sm:$0xff]
    %v289 = vld [vmem:[#allocation8 + $0x2d0] sm:$0xff]
    %v290 = vld [vmem:[#allocation8 + $0x2d8] sm:$0xff]
    %v291 = vld [vmem:[#allocation8 + $0x2e0] sm:$0xff]
    %v292 = vld [vmem:[#allocation8 + $0x2e8] sm:$0xff]
    %v293 = vld [vmem:[#allocation8 + $0x2f0] sm:$0xff]
    %v294 = vld [vmem:[#allocation8 + $0x2f8] sm:$0xff]
    %v295 = vld [vmem:[#allocation8 + $0x300] sm:$0xff]
    %v296 = vld [vmem:[#allocation8 + $0x308] sm:$0xff]
    %v297 = vld [vmem:[#allocation8 + $0x310] sm:$0xff]
    %v298 = vld [vmem:[#allocation8 + $0x318] sm:$0xff]
    %v299 = vld [vmem:[#allocation8 + $0x320] sm:$0xff]
    %v300 = vld [vmem:[#allocation8 + $0x328] sm:$0xff]
    %v301 = vld [vmem:[#allocation8 + $0x330] sm:$0xff]
    %v302 = vld [vmem:[#allocation8 + $0x338] sm:$0xff]
    %v303 = vld [vmem:[#allocation8 + $0x340] sm:$0xff]
    %v304 = vld [vmem:[#allocation8 + $0x348] sm:$0xff]
    %v305 = vld [vmem:[#allocation8 + $0x350] sm:$0xff]
    %v306 = vld [vmem:[#allocation8 + $0x358] sm:$0xff]
    %v307 = vld [vmem:[#allocation8 + $0x360] sm:$0xff]
    %v308 = vld [vmem:[#allocation8 + $0x368] sm:$0xff]
    %v309 = vld [vmem:[#allocation8 + $0x370] sm:$0xff]
    %v310 = vld [vmem:[#allocation8 + $0x378] sm:$0xff]
    %v311 = vld [vmem:[#allocation8 + $0x380] sm:$0xff]
    %v312 = vld [vmem:[#allocation8 + $0x388] sm:$0xff]
    %v313 = vld [vmem:[#allocation8 + $0x390] sm:$0xff]
    %v314 = vld [vmem:[#allocation8 + $0x398] sm:$0xff]
    %v315 = vld [vmem:[#allocation8 + $0x3a0] sm:$0xff]
    %v316 = vld [vmem:[#allocation8 + $0x3a8] sm:$0xff]
    %v317 = vld [vmem:[#allocation8 + $0x3b0] sm:$0xff]
    %v318 = vld [vmem:[#allocation8 + $0x3b8] sm:$0xff]
    %v319 = vld [vmem:[#allocation8 + $0x3c0] sm:$0xff]
    %v320 = vld [vmem:[#allocation8 + $0x3c8] sm:$0xff]
    %v321 = vld [vmem:[#allocation8 + $0x3d0] sm:$0xff]
    %v322 = vld [vmem:[#allocation8 + $0x3d8] sm:$0xff]
    %v323 = vld [vmem:[#allocation8 + $0x3e0] sm:$0xff]
    %v324 = vld [vmem:[#allocation8 + $0x3e8] sm:$0xff]
    %v325 = vld [vmem:[#allocation8 + $0x3f0] sm:$0xff]
    %v326 = vld [vmem:[#allocation8 + $0x3f8] sm:$0xff]
    %v327 = vld [vmem:[#allocation10] sm:$0x1]
    %v329 = vlaneseq
    %v330 = vshrl.u32 %v329, 7
    %v331 = vsub.s32 0, %v330
    %v332 = vrot.slane %v327, %v331
    %334 = vmatprep.subr.mxu0 0.0
    %335 = vmatpush1.msra.mxu0 %v199
    %336 = vmatprep.subr.mxu0 0.0
    %337 = vmatpush1.msra.mxu0 %v200
    %338 = vmatprep.subr.mxu0 0.0
    %339 = vmatpush1.msra.mxu0 %v201
    %340 = vmatprep.subr.mxu0 0.0
    %341 = vmatpush1.msra.mxu0 %v202
    %342 = vmatprep.subr.mxu0 0.0
    %343 = vmatpush1.msra.mxu0 %v203
    %344 = vmatprep.subr.mxu0 0.0
    %345 = vmatpush1.msra.mxu0 %v204
    %346 = vmatprep.subr.mxu0 0.0
    %347 = vmatpush1.msra.mxu0 %v205
    %348 = vmatprep.subr.mxu0 0.0
    %349 = vmatpush1.msra.mxu0 %v206
    %350 = vmatprep.subr.mxu0 0.0
    %351 = vmatpush1.msra.mxu0 %v207
    %352 = vmatprep.subr.mxu0 0.0
    %353 = vmatpush1.msra.mxu0 %v208
    %354 = vmatprep.subr.mxu0 0.0
    %355 = vmatpush1.msra.mxu0 %v209
    %356 = vmatprep.subr.mxu0 0.0
    %357 = vmatpush1.msra.mxu0 %v210
    %358 = vmatprep.subr.mxu0 0.0
    %359 = vmatpush1.msra.mxu0 %v211
    %360 = vmatprep.subr.mxu0 0.0
    %361 = vmatpush1.msra.mxu0 %v212
    %362 = vmatprep.subr.mxu0 0.0
    %363 = vmatpush1.msra.mxu0 %v213
    %364 = vmatprep.subr.mxu0 0.0
    %365 = vmatpush1.msra.mxu0 %v214
    %366 = vmatprep.subr.mxu0 0.0
    %367 = vmatpush1.msra.mxu0 %v215
    %368 = vmatprep.subr.mxu0 0.0
    %369 = vmatpush1.msra.mxu0 %v216
    %370 = vmatprep.subr.mxu0 0.0
    %371 = vmatpush1.msra.mxu0 %v217
    %372 = vmatprep.subr.mxu0 0.0
    %373 = vmatpush1.msra.mxu0 %v218
    %374 = vmatprep.subr.mxu0 0.0
    %375 = vmatpush1.msra.mxu0 %v219
    %376 = vmatprep.subr.mxu0 0.0
    %377 = vmatpush1.msra.mxu0 %v220
    %378 = vmatprep.subr.mxu0 0.0
    %379 = vmatpush1.msra.mxu0 %v221
    %380 = vmatprep.subr.mxu0 0.0
    %381 = vmatpush1.msra.mxu0 %v222
    %382 = vmatprep.subr.mxu0 0.0
    %383 = vmatpush1.msra.mxu0 %v223
    %384 = vmatprep.subr.mxu0 0.0
    %385 = vmatpush1.msra.mxu0 %v224
    %386 = vmatprep.subr.mxu0 0.0
    %387 = vmatpush1.msra.mxu0 %v225
    %388 = vmatprep.subr.mxu0 0.0
    %389 = vmatpush1.msra.mxu0 %v226
    %390 = vmatprep.subr.mxu0 0.0
    %391 = vmatpush1.msra.mxu0 %v227
    %392 = vmatprep.subr.mxu0 0.0
    %393 = vmatpush1.msra.mxu0 %v228
    %394 = vmatprep.subr.mxu0 0.0
    %395 = vmatpush1.msra.mxu0 %v229
    %396 = vmatprep.subr.mxu0 0.0
    %397 = vmatpush1.msra.mxu0 %v230
    %398 = vmatprep.mubr.f32.mxu0 %v192
    %399 = vmatmul.mubr.f32.gmra.mrb[0].mxu0 %v191
    %v400 = vpop.f32.mrb[0].mxu0
    %v401 = vadd.f32 %v332, %v400
    %v402 = vpop.f32.mrb[0].mxu0
    %403 = vdwg.mxu0
    %404 = vmatprep.subr.mxu0 0.0
    %405 = vmatpush1.msra.mxu0 %v231
    %406 = vmatprep.subr.mxu0 0.0
    %407 = vmatpush1.msra.mxu0 %v232
    %408 = vmatprep.subr.mxu0 0.0
    %409 = vmatpush1.msra.mxu0 %v233
    %410 = vmatprep.subr.mxu0 0.0
    %411 = vmatpush1.msra.mxu0 %v234
    %412 = vmatprep.subr.mxu0 0.0
    %413 = vmatpush1.msra.mxu0 %v235
    %414 = vmatprep.subr.mxu0 0.0
    %415 = vmatpush1.msra.mxu0 %v236
    %416 = vmatprep.subr.mxu0 0.0
    %417 = vmatpush1.msra.mxu0 %v237
    %418 = vmatprep.subr.mxu0 0.0
    %419 = vmatpush1.msra.mxu0 %v238
    %420 = vmatprep.subr.mxu0 0.0
    %421 = vmatpush1.msra.mxu0 %v239
    %422 = vmatprep.subr.mxu0 0.0
    %423 = vmatpush1.msra.mxu0 %v240
    %424 = vmatprep.subr.mxu0 0.0
    %425 = vmatpush1.msra.mxu0 %v241
    %426 = vmatprep.subr.mxu0 0.0
    %427 = vmatpush1.msra.mxu0 %v242
    %428 = vmatprep.subr.mxu0 0.0
    %429 = vmatpush1.msra.mxu0 %v243
    %430 = vmatprep.subr.mxu0 0.0
    %431 = vmatpush1.msra.mxu0 %v244
    %432 = vmatprep.subr.mxu0 0.0
    %433 = vmatpush1.msra.mxu0 %v245
    %434 = vmatprep.subr.mxu0 0.0
    %435 = vmatpush1.msra.mxu0 %v246
    %436 = vmatprep.subr.mxu0 0.0
    %437 = vmatpush1.msra.mxu0 %v247
    %438 = vmatprep.subr.mxu0 0.0
    %439 = vmatpush1.msra.mxu0 %v248
    %440 = vmatprep.subr.mxu0 0.0
    %441 = vmatpush1.msra.mxu0 %v249
    %442 = vmatprep.subr.mxu0 0.0
    %443 = vmatpush1.msra.mxu0 %v250
    %444 = vmatprep.subr.mxu0 0.0
    %445 = vmatpush1.msra.mxu0 %v251
    %446 = vmatprep.subr.mxu0 0.0
    %447 = vmatpush1.msra.mxu0 %v252
    %448 = vmatprep.subr.mxu0 0.0
    %449 = vmatpush1.msra.mxu0 %v253
    %450 = vmatprep.subr.mxu0 0.0
    %451 = vmatpush1.msra.mxu0 %v254
    %452 = vmatprep.subr.mxu0 0.0
    %453 = vmatpush1.msra.mxu0 %v255
    %454 = vmatprep.subr.mxu0 0.0
    %455 = vmatpush1.msra.mxu0 %v256
    %456 = vmatprep.subr.mxu0 0.0
    %457 = vmatpush1.msra.mxu0 %v257
    %458 = vmatprep.subr.mxu0 0.0
    %459 = vmatpush1.msra.mxu0 %v258
    %460 = vmatprep.subr.mxu0 0.0
    %461 = vmatpush1.msra.mxu0 %v259
    %462 = vmatprep.subr.mxu0 0.0
    %463 = vmatpush1.msra.mxu0 %v260
    %464 = vmatprep.subr.mxu0 0.0
    %465 = vmatpush1.msra.mxu0 %v261
    %466 = vmatprep.subr.mxu0 0.0
    %467 = vmatpush1.msra.mxu0 %v262
    %468 = vmatprep.mubr.f32.mxu0 %v194
    %469 = vmatmul.mubr.f32.gmra.mrb[0].mxu0 %v193
    %v470 = vpop.f32.mrb[0].mxu0
    %v471 = vadd.f32 %v401, %v470
    %v472 = vpop.f32.mrb[0].mxu0
    %473 = vdwg.mxu0
    %474 = vmatprep.subr.mxu0 0.0
    %475 = vmatpush1.msra.mxu0 %v263
    %476 = vmatprep.subr.mxu0 0.0
    %477 = vmatpush1.msra.mxu0 %v264
    %478 = vmatprep.subr.mxu0 0.0
    %479 = vmatpush1.msra.mxu0 %v265
    %480 = vmatprep.subr.mxu0 0.0
    %481 = vmatpush1.msra.mxu0 %v266
    %482 = vmatprep.subr.mxu0 0.0
    %483 = vmatpush1.msra.mxu0 %v267
    %484 = vmatprep.subr.mxu0 0.0
    %485 = vmatpush1.msra.mxu0 %v268
    %486 = vmatprep.subr.mxu0 0.0
    %487 = vmatpush1.msra.mxu0 %v269
    %488 = vmatprep.subr.mxu0 0.0
    %489 = vmatpush1.msra.mxu0 %v270
    %490 = vmatprep.subr.mxu0 0.0
    %491 = vmatpush1.msra.mxu0 %v271
    %492 = vmatprep.subr.mxu0 0.0
    %493 = vmatpush1.msra.mxu0 %v272
    %494 = vmatprep.subr.mxu0 0.0
    %495 = vmatpush1.msra.mxu0 %v273
    %496 = vmatprep.subr.mxu0 0.0
    %497 = vmatpush1.msra.mxu0 %v274
    %498 = vmatprep.subr.mxu0 0.0
    %499 = vmatpush1.msra.mxu0 %v275
    %500 = vmatprep.subr.mxu0 0.0
    %501 = vmatpush1.msra.mxu0 %v276
    %502 = vmatprep.subr.mxu0 0.0
    %503 = vmatpush1.msra.mxu0 %v277
    %504 = vmatprep.subr.mxu0 0.0
    %505 = vmatpush1.msra.mxu0 %v278
    %506 = vmatprep.subr.mxu0 0.0
    %507 = vmatpush1.msra.mxu0 %v279
    %508 = vmatprep.subr.mxu0 0.0
    %509 = vmatpush1.msra.mxu0 %v280
    %510 = vmatprep.subr.mxu0 0.0
    %511 = vmatpush1.msra.mxu0 %v281
    %512 = vmatprep.subr.mxu0 0.0
    %513 = vmatpush1.msra.mxu0 %v282
    %514 = vmatprep.subr.mxu0 0.0
    %515 = vmatpush1.msra.mxu0 %v283
    %516 = vmatprep.subr.mxu0 0.0
    %517 = vmatpush1.msra.mxu0 %v284
    %518 = vmatprep.subr.mxu0 0.0
    %519 = vmatpush1.msra.mxu0 %v285
    %520 = vmatprep.subr.mxu0 0.0
    %521 = vmatpush1.msra.mxu0 %v286
    %522 = vmatprep.subr.mxu0 0.0
    %523 = vmatpush1.msra.mxu0 %v287
    %524 = vmatprep.subr.mxu0 0.0
    %525 = vmatpush1.msra.mxu0 %v288
    %526 = vmatprep.subr.mxu0 0.0
    %527 = vmatpush1.msra.mxu0 %v289
    %528 = vmatprep.subr.mxu0 0.0
    %529 = vmatpush1.msra.mxu0 %v290
    %530 = vmatprep.subr.mxu0 0.0
    %531 = vmatpush1.msra.mxu0 %v291
    %532 = vmatprep.subr.mxu0 0.0
    %533 = vmatpush1.msra.mxu0 %v292
    %534 = vmatprep.subr.mxu0 0.0
    %535 = vmatpush1.msra.mxu0 %v293
    %536 = vmatprep.subr.mxu0 0.0
    %537 = vmatpush1.msra.mxu0 %v294
    %538 = vmatprep.mubr.f32.mxu0 %v196
    %539 = vmatmul.mubr.f32.gmra.mrb[0].mxu0 %v195
    %v540 = vpop.f32.mrb[0].mxu0
    %v541 = vadd.f32 %v471, %v540
    %v542 = vpop.f32.mrb[0].mxu0
    %543 = vdwg.mxu0
    %544 = vmatprep.subr.mxu0 0.0
    %545 = vmatpush1.msra.mxu0 %v295
    %546 = vmatprep.subr.mxu0 0.0
    %547 = vmatpush1.msra.mxu0 %v296
    %548 = vmatprep.subr.mxu0 0.0
    %549 = vmatpush1.msra.mxu0 %v297
    %550 = vmatprep.subr.mxu0 0.0
    %551 = vmatpush1.msra.mxu0 %v298
    %552 = vmatprep.subr.mxu0 0.0
    %553 = vmatpush1.msra.mxu0 %v299
    %554 = vmatprep.subr.mxu0 0.0
    %555 = vmatpush1.msra.mxu0 %v300
    %556 = vmatprep.subr.mxu0 0.0
    %557 = vmatpush1.msra.mxu0 %v301
    %558 = vmatprep.subr.mxu0 0.0
    %559 = vmatpush1.msra.mxu0 %v302
    %560 = vmatprep.subr.mxu0 0.0
    %561 = vmatpush1.msra.mxu0 %v303
    %562 = vmatprep.subr.mxu0 0.0
    %563 = vmatpush1.msra.mxu0 %v304
    %564 = vmatprep.subr.mxu0 0.0
    %565 = vmatpush1.msra.mxu0 %v305
    %566 = vmatprep.subr.mxu0 0.0
    %567 = vmatpush1.msra.mxu0 %v306
    %568 = vmatprep.subr.mxu0 0.0
    %569 = vmatpush1.msra.mxu0 %v307
    %570 = vmatprep.subr.mxu0 0.0
    %571 = vmatpush1.msra.mxu0 %v308
    %572 = vmatprep.subr.mxu0 0.0
    %573 = vmatpush1.msra.mxu0 %v309
    %574 = vmatprep.subr.mxu0 0.0
    %575 = vmatpush1.msra.mxu0 %v310
    %576 = vmatprep.subr.mxu0 0.0
    %577 = vmatpush1.msra.mxu0 %v311
    %578 = vmatprep.subr.mxu0 0.0
    %579 = vmatpush1.msra.mxu0 %v312
    %580 = vmatprep.subr.mxu0 0.0
    %581 = vmatpush1.msra.mxu0 %v313
    %582 = vmatprep.subr.mxu0 0.0
    %583 = vmatpush1.msra.mxu0 %v314
    %584 = vmatprep.subr.mxu0 0.0
    %585 = vmatpush1.msra.mxu0 %v315
    %586 = vmatprep.subr.mxu0 0.0
    %587 = vmatpush1.msra.mxu0 %v316
    %588 = vmatprep.subr.mxu0 0.0
    %589 = vmatpush1.msra.mxu0 %v317
    %590 = vmatprep.subr.mxu0 0.0
    %591 = vmatpush1.msra.mxu0 %v318
    %592 = vmatprep.subr.mxu0 0.0
    %593 = vmatpush1.msra.mxu0 %v319
    %594 = vmatprep.subr.mxu0 0.0
    %595 = vmatpush1.msra.mxu0 %v320
    %596 = vmatprep.subr.mxu0 0.0
    %597 = vmatpush1.msra.mxu0 %v321
    %598 = vmatprep.subr.mxu0 0.0
    %599 = vmatpush1.msra.mxu0 %v322
    %600 = vmatprep.subr.mxu0 0.0
    %601 = vmatpush1.msra.mxu0 %v323
    %602 = vmatprep.subr.mxu0 0.0
    %603 = vmatpush1.msra.mxu0 %v324
    %604 = vmatprep.subr.mxu0 0.0
    %605 = vmatpush1.msra.mxu0 %v325
    %606 = vmatprep.subr.mxu0 0.0
    %607 = vmatpush1.msra.mxu0 %v326
    %608 = vmatprep.mubr.f32.mxu0 %v198
    %609 = vmatmul.mubr.f32.gmra.mrb[0].mxu0 %v197
    %v610 = vpop.f32.mrb[0].mxu0
    %v611 = vadd.f32 %v541, %v610
    %v612 = vpop.f32.mrb[0].mxu0
    %613 = vdwg.mxu0
    %v614 = vld [vmem:[#allocation2] sm:$0xff]
    %v615 = vld [vmem:[#allocation11] sm:$0xff]
    %v616 = vld [vmem:[#allocation11 + $0x8] sm:$0xff]
    %v617 = vld [vmem:[#allocation11 + $0x10] sm:$0xff]
    %v618 = vld [vmem:[#allocation11 + $0x18] sm:$0xff]
    %v619 = vld [vmem:[#allocation11 + $0x20] sm:$0xff]
    %v620 = vld [vmem:[#allocation11 + $0x28] sm:$0xff]
    %v621 = vld [vmem:[#allocation11 + $0x30] sm:$0xff]
    %v622 = vld [vmem:[#allocation11 + $0x38] sm:$0xff]
    %v623 = vld [vmem:[#allocation11 + $0x40] sm:$0xff]
    %v624 = vld [vmem:[#allocation11 + $0x48] sm:$0xff]
    %v625 = vld [vmem:[#allocation11 + $0x50] sm:$0xff]
    %v626 = vld [vmem:[#allocation11 + $0x58] sm:$0xff]
    %v627 = vld [vmem:[#allocation11 + $0x60] sm:$0xff]
    %v628 = vld [vmem:[#allocation11 + $0x68] sm:$0xff]
    %v629 = vld [vmem:[#allocation11 + $0x70] sm:$0xff]
    %v630 = vld [vmem:[#allocation11 + $0x78] sm:$0xff]
    %v631 = vld [vmem:[#allocation13] sm:$0x1]
    %v633 = vlaneseq
    %v634 = vshrl.u32 %v633, 7
    %v635 = vsub.s32 0, %v634
    %v636 = vrot.slane %v631, %v635
    %638 = vmatprep.subr.mxu0 0.0
    %639 = vmatpush1.msra.mxu0 %v615
    %640 = vmatprep.subr.mxu0 0.0
    %641 = vmatpush1.msra.mxu0 %v616
    %642 = vmatprep.subr.mxu0 0.0
    %643 = vmatpush1.msra.mxu0 %v617
    %644 = vmatprep.subr.mxu0 0.0
    %645 = vmatpush1.msra.mxu0 %v618
    %646 = vmatprep.subr.mxu0 0.0
    %647 = vmatpush1.msra.mxu0 %v619
    %648 = vmatprep.subr.mxu0 0.0
    %649 = vmatpush1.msra.mxu0 %v620
    %650 = vmatprep.subr.mxu0 0.0
    %651 = vmatpush1.msra.mxu0 %v621
    %652 = vmatprep.subr.mxu0 0.0
    %653 = vmatpush1.msra.mxu0 %v622
    %654 = vmatprep.subr.mxu0 0.0
    %655 = vmatpush1.msra.mxu0 %v623
    %656 = vmatprep.subr.mxu0 0.0
    %657 = vmatpush1.msra.mxu0 %v624
    %658 = vmatprep.subr.mxu0 0.0
    %659 = vmatpush1.msra.mxu0 %v625
    %660 = vmatprep.subr.mxu0 0.0
    %661 = vmatpush1.msra.mxu0 %v626
    %662 = vmatprep.subr.mxu0 0.0
    %663 = vmatpush1.msra.mxu0 %v627
    %664 = vmatprep.subr.mxu0 0.0
    %665 = vmatpush1.msra.mxu0 %v628
    %666 = vmatprep.subr.mxu0 0.0
    %667 = vmatpush1.msra.mxu0 %v629
    %668 = vmatprep.subr.mxu0 0.0
    %669 = vmatpush1.msra.mxu0 %v630
    %670 = vmatprep.subr.mxu0 0.0
    %671 = vmatpush1.msra.mxu0 0.0
    %672 = vmatprep.subr.mxu0 0.0
    %673 = vmatpush1.msra.mxu0 0.0
    %674 = vmatprep.subr.mxu0 0.0
    %675 = vmatpush1.msra.mxu0 0.0
    %676 = vmatprep.subr.mxu0 0.0
    %677 = vmatpush1.msra.mxu0 0.0
    %678 = vmatprep.subr.mxu0 0.0
    %679 = vmatpush1.msra.mxu0 0.0
    %680 = vmatprep.subr.mxu0 0.0
    %681 = vmatpush1.msra.mxu0 0.0
    %682 = vmatprep.subr.mxu0 0.0
    %683 = vmatpush1.msra.mxu0 0.0
    %684 = vmatprep.subr.mxu0 0.0
    %685 = vmatpush1.msra.mxu0 0.0
    %686 = vmatprep.subr.mxu0 0.0
    %687 = vmatpush1.msra.mxu0 0.0
    %688 = vmatprep.subr.mxu0 0.0
    %689 = vmatpush1.msra.mxu0 0.0
    %690 = vmatprep.subr.mxu0 0.0
    %691 = vmatpush1.msra.mxu0 0.0
    %692 = vmatprep.subr.mxu0 0.0
    %693 = vmatpush1.msra.mxu0 0.0
    %694 = vmatprep.subr.mxu0 0.0
    %695 = vmatpush1.msra.mxu0 0.0
    %696 = vmatprep.subr.mxu0 0.0
    %697 = vmatpush1.msra.mxu0 0.0
    %698 = vmatprep.subr.mxu0 0.0
    %699 = vmatpush1.msra.mxu0 0.0
    %700 = vmatprep.subr.mxu0 0.0
    %701 = vmatpush1.msra.mxu0 0.0
    %702 = vmatprep.mubr.f32.mxu0 0.0
    %703 = vmatmul.mubr.f32.gmra.mrb[0].mxu0 %v614
    %v704 = vpop.f32.mrb[0].mxu0
    %v705 = vadd.f32 %v636, %v704
    %v706 = vpop.f32.mrb[0].mxu0
    %707 = vdwg.mxu0
    %v708 = vmax.f32 %v705, 0.0
    %v709 = vld [vmem:[#allocation14] sm:$0xff]
    %v710 = vld [vmem:[#allocation14 + $0x8] sm:$0xff]
    %v711 = vld [vmem:[#allocation14 + $0x10] sm:$0xff]
    %v712 = vld [vmem:[#allocation14 + $0x18] sm:$0xff]
    %v713 = vld [vmem:[#allocation14 + $0x20] sm:$0xff]
    %v714 = vld [vmem:[#allocation14 + $0x28] sm:$0xff]
    %v715 = vld [vmem:[#allocation14 + $0x30] sm:$0xff]
    %v716 = vld [vmem:[#allocation14 + $0x38] sm:$0xff]
    %v717 = vld [vmem:[#allocation14 + $0x40] sm:$0xff]
    %v718 = vld [vmem:[#allocation14 + $0x48] sm:$0xff]
    %v719 = vld [vmem:[#allocation14 + $0x50] sm:$0xff]
    %v720 = vld [vmem:[#allocation14 + $0x58] sm:$0xff]
    %v721 = vld [vmem:[#allocation14 + $0x60] sm:$0xff]
    %v722 = vld [vmem:[#allocation14 + $0x68] sm:$0xff]
    %v723 = vld [vmem:[#allocation14 + $0x70] sm:$0xff]
    %v724 = vld [vmem:[#allocation14 + $0x78] sm:$0xff]
    %v725 = vld [vmem:[#allocation16] sm:$0xff]
    %v726 = vld [vmem:[#allocation16 + $0x8] sm:$0xff]
    %v727 = vld [vmem:[#allocation16 + $0x10] sm:$0xff]
    %v728 = vld [vmem:[#allocation16 + $0x18] sm:$0xff]
    %v729 = vld [vmem:[#allocation16 + $0x20] sm:$0xff]
    %v730 = vld [vmem:[#allocation16 + $0x28] sm:$0xff]
    %v731 = vld [vmem:[#allocation16 + $0x30] sm:$0xff]
    %v732 = vld [vmem:[#allocation16 + $0x38] sm:$0xff]
    %v733 = vld [vmem:[#allocation16 + $0x40] sm:$0xff]
    %v734 = vld [vmem:[#allocation16 + $0x48] sm:$0xff]
    %v735 = vld [vmem:[#allocation16 + $0x50] sm:$0xff]
    %v736 = vld [vmem:[#allocation16 + $0x58] sm:$0xff]
    %v737 = vld [vmem:[#allocation16 + $0x60] sm:$0xff]
    %v738 = vld [vmem:[#allocation16 + $0x68] sm:$0xff]
    %v739 = vld [vmem:[#allocation16 + $0x70] sm:$0xff]
    %v740 = vld [vmem:[#allocation16 + $0x78] sm:$0xff]
    %741 = vmatprep.subr.mxu0 0.0
    %742 = vmatpush1.msra.mxu0 %v725
    %743 = vmatprep.subr.mxu0 0.0
    %744 = vmatpush1.msra.mxu0 %v726
    %745 = vmatprep.subr.mxu0 0.0
    %746 = vmatpush1.msra.mxu0 %v727
    %747 = vmatprep.subr.mxu0 0.0
    %748 = vmatpush1.msra.mxu0 %v728
    %749 = vmatprep.subr.mxu0 0.0
    %750 = vmatpush1.msra.mxu0 %v729
    %751 = vmatprep.subr.mxu0 0.0
    %752 = vmatpush1.msra.mxu0 %v730
    %753 = vmatprep.subr.mxu0 0.0
    %754 = vmatpush1.msra.mxu0 %v731
    %755 = vmatprep.subr.mxu0 0.0
    %756 = vmatpush1.msra.mxu0 %v732
    %757 = vmatprep.subr.mxu0 0.0
    %758 = vmatpush1.msra.mxu0 %v733
    %759 = vmatprep.subr.mxu0 0.0
    %760 = vmatpush1.msra.mxu0 %v734
    %761 = vmatprep.subr.mxu0 0.0
    %762 = vmatpush1.msra.mxu0 %v735
    %763 = vmatprep.subr.mxu0 0.0
    %764 = vmatpush1.msra.mxu0 %v736
    %765 = vmatprep.subr.mxu0 0.0
    %766 = vmatpush1.msra.mxu0 %v737
    %767 = vmatprep.subr.mxu0 0.0
    %768 = vmatpush1.msra.mxu0 %v738
    %769 = vmatprep.subr.mxu0 0.0
    %770 = vmatpush1.msra.mxu0 %v739
    %771 = vmatprep.subr.mxu0 0.0
    %772 = vmatpush1.msra.mxu0 %v740
    %773 = vmatprep.subr.mxu0 0.0
    %774 = vmatpush1.msra.mxu0 0.0
    %775 = vmatprep.subr.mxu0 0.0
    %776 = vmatpush1.msra.mxu0 0.0
    %777 = vmatprep.subr.mxu0 0.0
    %778 = vmatpush1.msra.mxu0 0.0
    %779 = vmatprep.subr.mxu0 0.0
    %780 = vmatpush1.msra.mxu0 0.0
    %781 = vmatprep.subr.mxu0 0.0
    %782 = vmatpush1.msra.mxu0 0.0
    %783 = vmatprep.subr.mxu0 0.0
    %784 = vmatpush1.msra.mxu0 0.0
    %785 = vmatprep.subr.mxu0 0.0
    %786 = vmatpush1.msra.mxu0 0.0
    %787 = vmatprep.subr.mxu0 0.0
    %788 = vmatpush1.msra.mxu0 0.0
    %789 = vmatprep.subr.mxu0 0.0
    %790 = vmatpush1.msra.mxu0 0.0
    %791 = vmatprep.subr.mxu0 0.0
    %792 = vmatpush1.msra.mxu0 0.0
    %793 = vmatprep.subr.mxu0 0.0
    %794 = vmatpush1.msra.mxu0 0.0
    %795 = vmatprep.subr.mxu0 0.0
    %796 = vmatpush1.msra.mxu0 0.0
    %797 = vmatprep.subr.mxu0 0.0
    %798 = vmatpush1.msra.mxu0 0.0
    %799 = vmatprep.subr.mxu0 0.0
    %800 = vmatpush1.msra.mxu0 0.0
    %801 = vmatprep.subr.mxu0 0.0
    %802 = vmatpush1.msra.mxu0 0.0
    %803 = vmatprep.subr.mxu0 0.0
    %804 = vmatpush1.msra.mxu0 0.0
    %805 = vmatprep.mubr.f32.mxu0 0.0
    %806 = vmatmul.mubr.f32.gmra.mrb[0].mxu0 %v611
    %v807 = vpop.f32.mrb[0].mxu0
    %v808 = vadd.f32 0.0, %v807
    %v809 = vpop.f32.mrb[0].mxu0
    %810 = vdwg.mxu0
    %811 = vmatprep.subr.mxu0 0.0
    %812 = vmatpush1.msra.mxu0 %v709
    %813 = vmatprep.subr.mxu0 0.0
    %814 = vmatpush1.msra.mxu0 %v710
    %815 = vmatprep.subr.mxu0 0.0
    %816 = vmatpush1.msra.mxu0 %v711
    %817 = vmatprep.subr.mxu0 0.0
    %818 = vmatpush1.msra.mxu0 %v712
    %819 = vmatprep.subr.mxu0 0.0
    %820 = vmatpush1.msra.mxu0 %v713
    %821 = vmatprep.subr.mxu0 0.0
    %822 = vmatpush1.msra.mxu0 %v714
    %823 = vmatprep.subr.mxu0 0.0
    %824 = vmatpush1.msra.mxu0 %v715
    %825 = vmatprep.subr.mxu0 0.0
    %826 = vmatpush1.msra.mxu0 %v716
    %827 = vmatprep.subr.mxu0 0.0
    %828 = vmatpush1.msra.mxu0 %v717
    %829 = vmatprep.subr.mxu0 0.0
    %830 = vmatpush1.msra.mxu0 %v718
    %831 = vmatprep.subr.mxu0 0.0
    %832 = vmatpush1.msra.mxu0 %v719
    %833 = vmatprep.subr.mxu0 0.0
    %834 = vmatpush1.msra.mxu0 %v720
    %835 = vmatprep.subr.mxu0 0.0
    %836 = vmatpush1.msra.mxu0 %v721
    %837 = vmatprep.subr.mxu0 0.0
    %838 = vmatpush1.msra.mxu0 %v722
    %839 = vmatprep.subr.mxu0 0.0
    %840 = vmatpush1.msra.mxu0 %v723
    %841 = vmatprep.subr.mxu0 0.0
    %842 = vmatpush1.msra.mxu0 %v724
    %843 = vmatprep.subr.mxu0 0.0
    %844 = vmatpush1.msra.mxu0 0.0
    %845 = vmatprep.subr.mxu0 0.0
    %846 = vmatpush1.msra.mxu0 0.0
    %847 = vmatprep.subr.mxu0 0.0
    %848 = vmatpush1.msra.mxu0 0.0
    %849 = vmatprep.subr.mxu0 0.0
    %850 = vmatpush1.msra.mxu0 0.0
    %851 = vmatprep.subr.mxu0 0.0
    %852 = vmatpush1.msra.mxu0 0.0
    %853 = vmatprep.subr.mxu0 0.0
    %854 = vmatpush1.msra.mxu0 0.0
    %855 = vmatprep.subr.mxu0 0.0
    %856 = vmatpush1.msra.mxu0 0.0
    %857 = vmatprep.subr.mxu0 0.0
    %858 = vmatpush1.msra.mxu0 0.0
    %859 = vmatprep.subr.mxu0 0.0
    %860 = vmatpush1.msra.mxu0 0.0
    %861 = vmatprep.subr.mxu0 0.0
    %862 = vmatpush1.msra.mxu0 0.0
    %863 = vmatprep.subr.mxu0 0.0
    %864 = vmatpush1.msra.mxu0 0.0
    %865 = vmatprep.subr.mxu0 0.0
    %866 = vmatpush1.msra.mxu0 0.0
    %867 = vmatprep.subr.mxu0 0.0
    %868 = vmatpush1.msra.mxu0 0.0
    %869 = vmatprep.subr.mxu0 0.0
    %870 = vmatpush1.msra.mxu0 0.0
    %871 = vmatprep.subr.mxu0 0.0
    %872 = vmatpush1.msra.mxu0 0.0
    %873 = vmatprep.subr.mxu0 0.0
    %874 = vmatpush1.msra.mxu0 0.0
    %875 = vmatprep.mubr.f32.mxu0 0.0
    %876 = vmatmul.mubr.f32.gmra.mrb[0].mxu0 %v708
    %v877 = vpop.f32.mrb[0].mxu0
    %v878 = vadd.f32 %v808, %v877
    %v879 = vpop.f32.mrb[0].mxu0
    %880 = vdwg.mxu0
    %v881 = vld [vmem:[#allocation17] sm:$0x1]
    %v883 = vlaneseq
    %v884 = vshrl.u32 %v883, 7
    %v885 = vsub.s32 0, %v884
    %v886 = vrot.slane %v881, %v885
    %v888 = vadd.f32 %v878, %v886
    %v889 = vmax.f32 %v888, 0.0
    %v890 = vld [vmem:[#allocation19] sm:$0xff]
    %v891 = vld [vmem:[#allocation19 + $0x8] sm:$0xff]
    %v892 = vld [vmem:[#allocation19 + $0x10] sm:$0xff]
    %v893 = vld [vmem:[#allocation19 + $0x18] sm:$0xff]
    %v894 = vld [vmem:[#allocation19 + $0x20] sm:$0xff]
    %v895 = vld [vmem:[#allocation19 + $0x28] sm:$0xff]
    %v896 = vld [vmem:[#allocation19 + $0x30] sm:$0xff]
    %v897 = vld [vmem:[#allocation19 + $0x38] sm:$0xff]
    %v898 = vld [vmem:[#allocation19 + $0x40] sm:$0xff]
    %v899 = vld [vmem:[#allocation19 + $0x48] sm:$0xff]
    %v900 = vld [vmem:[#allocation19 + $0x50] sm:$0xff]
    %v901 = vld [vmem:[#allocation19 + $0x58] sm:$0xff]
    %v902 = vld [vmem:[#allocation19 + $0x60] sm:$0xff]
    %v903 = vld [vmem:[#allocation19 + $0x68] sm:$0xff]
    %v904 = vld [vmem:[#allocation19 + $0x70] sm:$0xff]
    %v905 = vld [vmem:[#allocation19 + $0x78] sm:$0xff]
    %v906 = vld [vmem:[#allocation19 + $0x80] sm:$0xff]
    %v907 = vld [vmem:[#allocation19 + $0x88] sm:$0xff]
    %v908 = vld [vmem:[#allocation19 + $0x90] sm:$0xff]
    %v909 = vld [vmem:[#allocation19 + $0x98] sm:$0xff]
    %v910 = vld [vmem:[#allocation19 + $0xa0] sm:$0xff]
    %v911 = vld [vmem:[#allocation19 + $0xa8] sm:$0xff]
    %v912 = vld [vmem:[#allocation19 + $0xb0] sm:$0xff]
    %v913 = vld [vmem:[#allocation19 + $0xb8] sm:$0xff]
    %v914 = vld [vmem:[#allocation19 + $0xc0] sm:$0xff]
    %v915 = vld [vmem:[#allocation19 + $0xc8] sm:$0xff]
    %v916 = vld [vmem:[#allocation19 + $0xd0] sm:$0xff]
    %v917 = vld [vmem:[#allocation19 + $0xd8] sm:$0xff]
    %v918 = vld [vmem:[#allocation19 + $0xe0] sm:$0xff]
    %v919 = vld [vmem:[#allocation19 + $0xe8] sm:$0xff]
    %v920 = vld [vmem:[#allocation19 + $0xf0] sm:$0xff]
    %v921 = vld [vmem:[#allocation19 + $0xf8] sm:$0xff]
    %v922 = vld [vmem:[#allocation20] sm:$0x3]
    %v924 = vlaneseq
    %v925 = vshrl.u32 %v924, 7
    %v926 = vsub.s32 0, %v925
    %v927 = vrot.slane %v922, %v926
    %v928 = vlaneseq
    %v929 = vshrl.u32 %v928, 7
    %v930 = vsub.s32 1, %v929
    %v931 = vrot.slane %v922, %v930
    %934 = vmatprep.subr.mxu0 %v891
    %935 = vmatpush1.msra.mxu0 %v890
    %936 = vmatprep.subr.mxu0 %v893
    %937 = vmatpush1.msra.mxu0 %v892
    %938 = vmatprep.subr.mxu0 %v895
    %939 = vmatpush1.msra.mxu0 %v894
    %940 = vmatprep.subr.mxu0 %v897
    %941 = vmatpush1.msra.mxu0 %v896
    %942 = vmatprep.subr.mxu0 %v899
    %943 = vmatpush1.msra.mxu0 %v898
    %944 = vmatprep.subr.mxu0 %v901
    %945 = vmatpush1.msra.mxu0 %v900
    %946 = vmatprep.subr.mxu0 %v903
    %947 = vmatpush1.msra.mxu0 %v902
    %948 = vmatprep.subr.mxu0 %v905
    %949 = vmatpush1.msra.mxu0 %v904
    %950 = vmatprep.subr.mxu0 %v907
    %951 = vmatpush1.msra.mxu0 %v906
    %952 = vmatprep.subr.mxu0 %v909
    %953 = vmatpush1.msra.mxu0 %v908
    %954 = vmatprep.subr.mxu0 %v911
    %955 = vmatpush1.msra.mxu0 %v910
    %956 = vmatprep.subr.mxu0 %v913
    %957 = vmatpush1.msra.mxu0 %v912
    %958 = vmatprep.subr.mxu0 %v915
    %959 = vmatpush1.msra.mxu0 %v914
    %960 = vmatprep.subr.mxu0 %v917
    %961 = vmatpush1.msra.mxu0 %v916
    %962 = vmatprep.subr.mxu0 %v919
    %963 = vmatpush1.msra.mxu0 %v918
    %964 = vmatprep.subr.mxu0 %v921
    %965 = vmatpush1.msra.mxu0 %v920
    %966 = vmatprep.subr.mxu0 0.0
    %967 = vmatpush1.msra.mxu0 0.0
    %968 = vmatprep.subr.mxu0 0.0
    %969 = vmatpush1.msra.mxu0 0.0
    %970 = vmatprep.subr.mxu0 0.0
    %971 = vmatpush1.msra.mxu0 0.0
    %972 = vmatprep.subr.mxu0 0.0
    %973 = vmatpush1.msra.mxu0 0.0
    %974 = vmatprep.subr.mxu0 0.0
    %975 = vmatpush1.msra.mxu0 0.0
    %976 = vmatprep.subr.mxu0 0.0
    %977 = vmatpush1.msra.mxu0 0.0
    %978 = vmatprep.subr.mxu0 0.0
    %979 = vmatpush1.msra.mxu0 0.0
    %980 = vmatprep.subr.mxu0 0.0
    %981 = vmatpush1.msra.mxu0 0.0
    %982 = vmatprep.subr.mxu0 0.0
    %983 = vmatpush1.msra.mxu0 0.0
    %984 = vmatprep.subr.mxu0 0.0
    %985 = vmatpush1.msra.mxu0 0.0
    %986 = vmatprep.subr.mxu0 0.0
    %987 = vmatpush1.msra.mxu0 0.0
    %988 = vmatprep.subr.mxu0 0.0
    %989 = vmatpush1.msra.mxu0 0.0
    %990 = vmatprep.subr.mxu0 0.0
    %991 = vmatpush1.msra.mxu0 0.0
    %992 = vmatprep.subr.mxu0 0.0
    %993 = vmatpush1.msra.mxu0 0.0
    %994 = vmatprep.subr.mxu0 0.0
    %995 = vmatpush1.msra.mxu0 0.0
    %996 = vmatprep.subr.mxu0 0.0
    %997 = vmatpush1.msra.mxu0 0.0
    %998 = vmatprep.mubr.f32.mxu0 0.0
    %999 = vmatmul.mubr.f32.gmra.mrb[0].mxu0 %v889
    %v1000 = vpop.f32.mrb[0].mxu0
    %v1001 = vadd.f32 %v927, %v1000
    %v1002 = vpop.f32.mrb[0].mxu0
    %v1003 = vadd.f32 %v931, %v1002
    %1004 = vdwg.mxu0
    %v1005 = vmax.f32 %v1003, -20.0
    %v1006 = vmin.f32 %v1005, 2.0
    %v1007 = vmul.f32 %v1006, 1.442695
    %v1008 = vpow.pop %v1007
    %v1009 = vld [vmem:[#allocation7] sm:$0xff]
    %v1010 = vmul.f32 %v1008, %v1009
    %v1011 = vadd.f32 %v1001, %v1010
    %v1012 = vmul.f32 %v1009, -0.5
    %v1013 = vmul.f32 %v1012, %v1009
    %v1014 = vsub.f32 %v1013, %v1006
    %v1015 = vsub.f32 %v1014, 0.9189385
    %v1016 = vsub.f32 0.6931472, %v1011
    %v1017 = vmul.f32 %v1011, -2.0
    %v1018 = vmax.f32 %v1017, 0.0
    %v1019 = vand.u32 2147483647, %v1017
    %v1020 = vsub.f32 0.0, %v1019
    %v1021 = vmul.f32 %v1020, 1.442695
    %v1022 = vpow.pop %v1021
    %v1023 = vadd.f32 %v1022, 1.0
    %v1024 = vlog2.pop %v1023
    %v1025 = vmul.f32 %v1024, 0.6931472
    %v1026 = vmul.f32 -0.5, %v1022
    %v1027 = vadd.f32 %v1026, 1.0
    %v1028 = vmul.f32 %v1027, %v1022
    %v1029 = vand.u32 2147483647, %v1022
    %vm1030 = vcmp.lt.f32.partialorder %v1029, 0.0004427343
    %v1031 = vsel %vm1030, %v1028, %v1025
    %v1032 = vadd.f32 %v1018, %v1031
    %v1033 = vsub.f32 %v1016, %v1032
    %v1034 = vmul.f32 %v1033, 2.0
    %v1035 = vlaneseq
    %v1036 = vand.u32 %v1035, 127
    %vm1037 = vcmp.lt.s32.totalorder %v1036, 4
    %v1038 = vsub.f32 %v1015, %v1034
    %v1039 = vsel %vm1037, %v1038, 0.0
    %1040 = vadd.xlane.f32.xlu0 %v1039
    %v1041 = vpop.xlane.xlu0 %1040
    %v1042 = vtanh.pop %v1011
    %vm1043 = vcmp.eq.s32.totalorder %v1036, 4
    %v1044 = vsel %vm1043, %v1041, %v1042
    %1045 = vst [vmem:[#allocation22] sm:$0xff] %v1044
    // Predicated region
    $region98: #{tpu_custom_call.1} parent=1 // pred_check
      _
    $region99: #{tpu_custom_call.1} parent=1 // pred_check_branch
      %1047 = sbr.rel (0) target = $region101
    $region100: #{tpu_custom_call.1} parent=1 // pred_region
      %s1049 = ssub.s32 128, 128
      %1050 = vsyncadd [#allocation4], %s1049
      %s1052 = sshll.u32 [#allocation22], 4
      %s1053 = int_to_ptr.vmem [resolvable:$true] %s1052
      %1055 = dma.vmem_to_hbm [thread:$0]  %s1053, 128, %s12, [#allocation4]
    $region101: #{tpu_custom_call.1} parent=1 // pred_fallthru
      _
    // Predicated region
    $region102: #{tpu_custom_call.1} parent=1 // pred_check
      _
    $region103: #{tpu_custom_call.1} parent=1 // pred_check_branch
      %1057 = sbr.rel (0) target = $region105
    $region104: #{tpu_custom_call.1} parent=1 // pred_region
      %1058 = dma.done [#allocation4], 128
    $region105: #{tpu_custom_call.1} parent=1 // pred_fallthru
      _
    %1059 = vsyncpa [#allocation3], 1
    %1060 = vsyncpa [#allocation6], 1
    %1061 = vsyncpa [#allocation9], 1
    %1062 = vsyncpa [#allocation12], 1
    %1063 = vsyncpa [#allocation15], 1
    %1064 = vsyncpa [#allocation18], 1
    %1065 = vsyncpa [#allocation21], 1
    %1066 = vsyncpa [#allocation4], 1

</llo_original>
